<compile_context>
chip_gen: v5e
topology: v5e:2x2
jax: 0.10.0
libtpu: 0.0.40
codegen_flags: <defaults>
</compile_context>

<pallas_src>
import jax
import jax.numpy as jnp
from jax.experimental import pallas as pl
from jax.experimental.pallas import tpu as pltpu

IN_F = 3
OUT_F = 3
N_CAT = 5
OUT_W = N_CAT * OUT_F  # 15

# Batches below this are cheaper as a fused XLA expression than as a Pallas call.
_SMALL_BATCH_BYPASS = 4096


def _linear_cat_kernel(x_ref, wt_ref, o_ref):
    # wt_ref holds tile(W^T, (1, 5)) -> (IN_F, OUT_W): the Linear and the 5-way cat
    # collapse into a single K=3 VPU multiply-add chain plus one full-tile store.
    x = x_ref[...]                        # (tm, IN_F)    f32
    wt = wt_ref[...]                      # (IN_F, OUT_W) f32
    acc = x[:, 0:1] * wt[0:1, :]
    for k in range(1, IN_F):              # tiny static unroll, K = 3
        acc = acc + x[:, k:k + 1] * wt[k:k + 1, :]
    o_ref[...] = acc                      # single unmasked store of the (tm, 15) tile


def _linear_cat_pallas(x, w, *, tm_max):
    b = x.shape[0]
    wt_tiled = jnp.tile(w.T, (1, N_CAT))  # (IN_F, OUT_W); tiny, hoisted/folded by jit

    # Row tile: as large as the VMEM budget allows (each (tm, *) f32 block lane-pads
    # to (tm, 128) -> 512 B/row/buffer; x + out double-buffered ~= tm * 2 KiB, i.e.
    # ~16 MiB at tm=8192).  Multiple of 8 sublanes, <= b so a block never exceeds the
    # array; the ragged tail block gets a masked writeback.
    tm = min(tm_max, b)
    tm = max(8, (tm // 8) * 8)
    grid = (pl.cdiv(b, tm),)

    cost = pl.CostEstimate(
        flops=2 * b * IN_F * OUT_W,
        transcendentals=0,
        bytes_accessed=(b * IN_F + IN_F * OUT_W + b * OUT_W) * 4,
    )

    return pl.pallas_call(
        _linear_cat_kernel,
        out_shape=jax.ShapeDtypeStruct((b, OUT_W), jnp.float32),
        grid_spec=pltpu.PrefetchScalarGridSpec(
            num_scalar_prefetch=0,
            grid=grid,
            in_specs=[
                pl.BlockSpec((tm, IN_F), lambda i: (i, 0)),       # x row tile
                pl.BlockSpec((IN_F, OUT_W), lambda i: (0, 0)),    # tiled W^T, resident
            ],
            out_specs=pl.BlockSpec((tm, OUT_W), lambda i: (i, 0)),
        ),
        compiler_params=pltpu.CompilerParams(
            dimension_semantics=("parallel",),
            vmem_limit_bytes=32 * 1024 * 1024,   # fits tm=8192 on v5e / v6e / v7x
        ),
        cost_estimate=cost,
    )(x, wt_tiled)


def linear_cat(x, w, *, tm_max=8192, force_pallas=False):
    """out = concat([x @ w.T] * 5, axis=1).  x: (B, 3) f32, w: (3, 3) f32 -> (B, 15)."""
    b = x.shape[0]
    # Small-batch bypass: at the module's real input size (1, 3) the Pallas custom-call
    # boundary costs orders of magnitude more than the work; let XLA fuse it instead.
    if b < 8 or (b < _SMALL_BATCH_BYPASS and not force_pallas):
        return jnp.tile(x @ w.T, (1, N_CAT))
    return _linear_cat_pallas(x, w, tm_max=tm_max)


if __name__ == "__main__":
    key = jax.random.PRNGKey(0)
    kx, kw, kb1, kb2 = jax.random.split(key, 4)

    # nn.Linear(3, 3, bias=False) weight is (out_features, in_features) = (3, 3).
    w = jax.random.normal(kw, (OUT_F, IN_F), dtype=jnp.float32) * 0.1

    def ref_fn(xx):
        y = xx @ w.T
        return jnp.concatenate([y, y, y, y, y], axis=1)

    # 1) Module-spec input (1, 3): goes through the small-batch bypass.
    x_small = jax.random.normal(kx, (1, IN_F), dtype=jnp.float32)
    out_small = jax.block_until_ready(linear_cat(x_small, w))
    assert out_small.shape == (1, OUT_W), out_small.shape
    assert jnp.allclose(out_small, ref_fn(x_small), atol=1e-5, rtol=1e-5)

    # 2) Pallas path, tile-divisible batch.
    x_big = jax.random.normal(kb1, (1024, IN_F), dtype=jnp.float32)
    out_big = jax.block_until_ready(linear_cat(x_big, w, force_pallas=True))
    assert out_big.shape == (1024, OUT_W), out_big.shape
    assert jnp.allclose(out_big, ref_fn(x_big), atol=1e-5, rtol=1e-5)

    # 3) Pallas path, ragged batch (not a multiple of the row tile): exercises the
    #    masked tail writeback now that the wrapper pad / slice are gone.
    x_rag = jax.random.normal(kb2, (300, IN_F), dtype=jnp.float32)
    out_rag = jax.block_until_ready(linear_cat(x_rag, w, force_pallas=True))
    assert out_rag.shape == (300, OUT_W), out_rag.shape
    assert jnp.allclose(out_rag, ref_fn(x_rag), atol=1e-5, rtol=1e-5)

    print("KERNEL_OK")
</pallas_src>

<mosaic_0001>
module attributes {stable_mosaic.version = 11 : i64} {
  func.func @_linear_cat_kernel(%arg0: i32, %arg1: memref<1024x3xf32, #tpu.memory_space<vmem>>, %arg2: memref<3x15xf32, #tpu.memory_space<vmem>>, %arg3: memref<1024x15xf32, #tpu.memory_space<vmem>>) attributes {dimension_semantics = [#tpu.dimension_semantics<parallel>], iteration_bounds = array<i64: 1>, scalar_prefetch = 0 : i64, scratch_operands = 0 : i64, tpu.core_type = #tpu.core_type<tc>, window_params = [{transform_indices = @transform_0, window_bounds = array<i64: 1024, 3>}, {pipeline_mode = #tpu.pipeline_mode<synchronous>, transform_indices = @transform_1, window_bounds = array<i64: 3, 15>}, {transform_indices = @transform_2, window_bounds = array<i64: 1024, 15>}]} {
    %c0 = arith.constant 0 : index
    %c0_0 = arith.constant 0 : index
    %0 = vector.load %arg1[%c0, %c0_0] : memref<1024x3xf32, #tpu.memory_space<vmem>>, vector<1024x3xf32>
    %c0_1 = arith.constant 0 : index
    %c0_2 = arith.constant 0 : index
    %1 = vector.load %arg2[%c0_1, %c0_2] : memref<3x15xf32, #tpu.memory_space<vmem>>, vector<3x15xf32>
    %2 = vector.extract_strided_slice %0 {offsets = [0, 0], sizes = [1024, 1], strides = [1, 1]} : vector<1024x3xf32> to vector<1024x1xf32>
    %3 = vector.extract_strided_slice %1 {offsets = [0, 0], sizes = [1, 15], strides = [1, 1]} : vector<3x15xf32> to vector<1x15xf32>
    %4 = vector.broadcast %2 : vector<1024x1xf32> to vector<1024x15xf32>
    %5 = vector.broadcast %3 : vector<1x15xf32> to vector<1024x15xf32>
    %6 = arith.mulf %4, %5 : vector<1024x15xf32>
    %7 = vector.extract_strided_slice %0 {offsets = [0, 1], sizes = [1024, 1], strides = [1, 1]} : vector<1024x3xf32> to vector<1024x1xf32>
    %8 = vector.extract_strided_slice %1 {offsets = [1, 0], sizes = [1, 15], strides = [1, 1]} : vector<3x15xf32> to vector<1x15xf32>
    %9 = vector.broadcast %7 : vector<1024x1xf32> to vector<1024x15xf32>
    %10 = vector.broadcast %8 : vector<1x15xf32> to vector<1024x15xf32>
    %11 = arith.mulf %9, %10 : vector<1024x15xf32>
    %12 = arith.addf %6, %11 : vector<1024x15xf32>
    %13 = vector.extract_strided_slice %0 {offsets = [0, 2], sizes = [1024, 1], strides = [1, 1]} : vector<1024x3xf32> to vector<1024x1xf32>
    %14 = vector.extract_strided_slice %1 {offsets = [2, 0], sizes = [1, 15], strides = [1, 1]} : vector<3x15xf32> to vector<1x15xf32>
    %15 = vector.broadcast %13 : vector<1024x1xf32> to vector<1024x15xf32>
    %16 = vector.broadcast %14 : vector<1x15xf32> to vector<1024x15xf32>
    %17 = arith.mulf %15, %16 : vector<1024x15xf32>
    %18 = arith.addf %12, %17 : vector<1024x15xf32>
    %c0_3 = arith.constant 0 : index
    %c0_4 = arith.constant 0 : index
    %19 = vector.load %arg3[%c0_3, %c0_4] : memref<1024x15xf32, #tpu.memory_space<vmem>>, vector<1024x15xf32>
    tpu.vector_store %arg3[%c0_3, %c0_4], %18 {strides = array<i32>} : memref<1024x15xf32, #tpu.memory_space<vmem>>, vector<1024x15xf32>,
    return
  }
  func.func @transform_0(%arg0: i32) -> (i32, i32) {
    %c0_i32 = arith.constant 0 : i32
    %c0_i32_0 = arith.constant 0 : i32
    return %arg0, %c0_i32 : i32, i32
  }
  func.func @transform_1(%arg0: i32) -> (i32, i32) {
    %c0_i32 = arith.constant 0 : i32
    %c0_i32_0 = arith.constant 0 : i32
    %c0_i32_1 = arith.constant 0 : i32
    return %c0_i32, %c0_i32_0 : i32, i32
  }
  func.func @transform_2(%arg0: i32) -> (i32, i32) {
    %c0_i32 = arith.constant 0 : i32
    %c0_i32_0 = arith.constant 0 : i32
    return %arg0, %c0_i32 : i32, i32
  }
}

</mosaic_0001>

<llo_original>
// kernel: tpu_custom_call.1
$region0: #{tpu_custom_call.1}
  #allocation0 [shape = 'u32[]', space=smem, size = 0x4, offset = 0x4, fixed_abs, tag = 'smem constant byte address 0x4 - core index']
  #allocation1 [shape = 'u32[72,128]{1,0:T(1,128)}', space=vmem, size = 0x9000, scoped, tag = 'internal scratch']
  %s0 = inlined_call_operand.vmem [shape: f32[1024,3], index: 0, kind: input, shape index: {}]
  %s1 = inlined_call_operand.vmem [shape: f32[3,15], index: 1, kind: input, shape index: {}]
  %s2 = inlined_call_operand.vmem [shape: f32[1024,15], index: 2, kind: output, shape index: {}]
  %s3 = sld [smem:[#allocation0]]
  $region18: #{tpu_custom_call.1} parent=0
    _
  %s5 = ssub.s32 1, %s3
  %s6 = scalar_select 0, %s5, %s3
  // Predicated region
  $region2: #{tpu_custom_call.1} parent=0 // pred_check
    _
  $region3: #{tpu_custom_call.1} parent=0 // pred_check_branch
    %8 = sbr.rel (0) target = $region5
  $region4: #{tpu_custom_call.1} parent=0 // pred_region
    _
  $region5: #{tpu_custom_call.1} parent=0 // pred_fallthru
    _
  // Predicated region
  $region6: #{tpu_custom_call.1} parent=0 // pred_check
    _
  $region7: #{tpu_custom_call.1} parent=0 // pred_check_branch
    %10 = sbr.rel (0) target = $region9
  $region8: #{tpu_custom_call.1} parent=0 // pred_region
    _
  $region9: #{tpu_custom_call.1} parent=0 // pred_fallthru
    _
  %v11 = vld [vmem:[%s0] sm:$0xff]
  %v12 = vld [vmem:[%s0 + $0x8] sm:$0xff]
  %v13 = vld [vmem:[%s0 + $0x10] sm:$0xff]
  %v14 = vld [vmem:[%s0 + $0x18] sm:$0xff]
  %v15 = vld [vmem:[%s0 + $0x20] sm:$0xff]
  %v16 = vld [vmem:[%s0 + $0x28] sm:$0xff]
  %v17 = vld [vmem:[%s0 + $0x30] sm:$0xff]
  %v18 = vld [vmem:[%s0 + $0x38] sm:$0xff]
  %v19 = vld [vmem:[%s0 + $0x40] sm:$0xff]
  %v20 = vld [vmem:[%s0 + $0x48] sm:$0xff]
  %v21 = vld [vmem:[%s0 + $0x50] sm:$0xff]
  %v22 = vld [vmem:[%s0 + $0x58] sm:$0xff]
  %v23 = vld [vmem:[%s0 + $0x60] sm:$0xff]
  %v24 = vld [vmem:[%s0 + $0x68] sm:$0xff]
  %v25 = vld [vmem:[%s0 + $0x70] sm:$0xff]
  %v26 = vld [vmem:[%s0 + $0x78] sm:$0xff]
  %v27 = vld [vmem:[%s0 + $0x80] sm:$0xff]
  %v28 = vld [vmem:[%s0 + $0x88] sm:$0xff]
  %v29 = vld [vmem:[%s0 + $0x90] sm:$0xff]
  %v30 = vld [vmem:[%s0 + $0x98] sm:$0xff]
  %v31 = vld [vmem:[%s0 + $0xa0] sm:$0xff]
  %v32 = vld [vmem:[%s0 + $0xa8] sm:$0xff]
  %v33 = vld [vmem:[%s0 + $0xb0] sm:$0xff]
  %v34 = vld [vmem:[%s0 + $0xb8] sm:$0xff]
  %v35 = vld [vmem:[%s0 + $0xc0] sm:$0xff]
  %v36 = vld [vmem:[%s0 + $0xc8] sm:$0xff]
  %v37 = vld [vmem:[%s0 + $0xd0] sm:$0xff]
  %v38 = vld [vmem:[%s0 + $0xd8] sm:$0xff]
  %v39 = vld [vmem:[%s0 + $0xe0] sm:$0xff]
  %v40 = vld [vmem:[%s0 + $0xe8] sm:$0xff]
  %v41 = vld [vmem:[%s0 + $0xf0] sm:$0xff]
  %v42 = vld [vmem:[%s0 + $0xf8] sm:$0xff]
  %v43 = vld [vmem:[%s0 + $0x100] sm:$0xff]
  %v44 = vld [vmem:[%s0 + $0x108] sm:$0xff]
  %v45 = vld [vmem:[%s0 + $0x110] sm:$0xff]
  %v46 = vld [vmem:[%s0 + $0x118] sm:$0xff]
  %v47 = vld [vmem:[%s0 + $0x120] sm:$0xff]
  %v48 = vld [vmem:[%s0 + $0x128] sm:$0xff]
  %v49 = vld [vmem:[%s0 + $0x130] sm:$0xff]
  %v50 = vld [vmem:[%s0 + $0x138] sm:$0xff]
  %v51 = vld [vmem:[%s0 + $0x140] sm:$0xff]
  %v52 = vld [vmem:[%s0 + $0x148] sm:$0xff]
  %v53 = vld [vmem:[%s0 + $0x150] sm:$0xff]
  %v54 = vld [vmem:[%s0 + $0x158] sm:$0xff]
  %v55 = vld [vmem:[%s0 + $0x160] sm:$0xff]
  %v56 = vld [vmem:[%s0 + $0x168] sm:$0xff]
  %v57 = vld [vmem:[%s0 + $0x170] sm:$0xff]
  %v58 = vld [vmem:[%s0 + $0x178] sm:$0xff]
  %v59 = vld [vmem:[%s0 + $0x180] sm:$0xff]
  %v60 = vld [vmem:[%s0 + $0x188] sm:$0xff]
  %v61 = vld [vmem:[%s0 + $0x190] sm:$0xff]
  %v62 = vld [vmem:[%s0 + $0x198] sm:$0xff]
  %v63 = vld [vmem:[%s0 + $0x1a0] sm:$0xff]
  %v64 = vld [vmem:[%s0 + $0x1a8] sm:$0xff]
  %v65 = vld [vmem:[%s0 + $0x1b0] sm:$0xff]
  %v66 = vld [vmem:[%s0 + $0x1b8] sm:$0xff]
  %v67 = vld [vmem:[%s0 + $0x1c0] sm:$0xff]
  %v68 = vld [vmem:[%s0 + $0x1c8] sm:$0xff]
  %v69 = vld [vmem:[%s0 + $0x1d0] sm:$0xff]
  %v70 = vld [vmem:[%s0 + $0x1d8] sm:$0xff]
  %v71 = vld [vmem:[%s0 + $0x1e0] sm:$0xff]
  %v72 = vld [vmem:[%s0 + $0x1e8] sm:$0xff]
  %v73 = vld [vmem:[%s0 + $0x1f0] sm:$0xff]
  %v74 = vld [vmem:[%s0 + $0x1f8] sm:$0xff]
  %v75 = vld [vmem:[%s0 + $0x200] sm:$0xff]
  %v76 = vld [vmem:[%s0 + $0x208] sm:$0xff]
  %v77 = vld [vmem:[%s0 + $0x210] sm:$0xff]
  %v78 = vld [vmem:[%s0 + $0x218] sm:$0xff]
  %v79 = vld [vmem:[%s0 + $0x220] sm:$0xff]
  %v80 = vld [vmem:[%s0 + $0x228] sm:$0xff]
  %v81 = vld [vmem:[%s0 + $0x230] sm:$0xff]
  %v82 = vld [vmem:[%s0 + $0x238] sm:$0xff]
  %v83 = vld [vmem:[%s0 + $0x240] sm:$0xff]
  %v84 = vld [vmem:[%s0 + $0x248] sm:$0xff]
  %v85 = vld [vmem:[%s0 + $0x250] sm:$0xff]
  %v86 = vld [vmem:[%s0 + $0x258] sm:$0xff]
  %v87 = vld [vmem:[%s0 + $0x260] sm:$0xff]
  %v88 = vld [vmem:[%s0 + $0x268] sm:$0xff]
  %v89 = vld [vmem:[%s0 + $0x270] sm:$0xff]
  %v90 = vld [vmem:[%s0 + $0x278] sm:$0xff]
  %v91 = vld [vmem:[%s0 + $0x280] sm:$0xff]
  %v92 = vld [vmem:[%s0 + $0x288] sm:$0xff]
  %v93 = vld [vmem:[%s0 + $0x290] sm:$0xff]
  %v94 = vld [vmem:[%s0 + $0x298] sm:$0xff]
  %v95 = vld [vmem:[%s0 + $0x2a0] sm:$0xff]
  %v96 = vld [vmem:[%s0 + $0x2a8] sm:$0xff]
  %v97 = vld [vmem:[%s0 + $0x2b0] sm:$0xff]
  %v98 = vld [vmem:[%s0 + $0x2b8] sm:$0xff]
  %v99 = vld [vmem:[%s0 + $0x2c0] sm:$0xff]
  %v100 = vld [vmem:[%s0 + $0x2c8] sm:$0xff]
  %v101 = vld [vmem:[%s0 + $0x2d0] sm:$0xff]
  %v102 = vld [vmem:[%s0 + $0x2d8] sm:$0xff]
  %v103 = vld [vmem:[%s0 + $0x2e0] sm:$0xff]
  %v104 = vld [vmem:[%s0 + $0x2e8] sm:$0xff]
  %v105 = vld [vmem:[%s0 + $0x2f0] sm:$0xff]
  %v106 = vld [vmem:[%s0 + $0x2f8] sm:$0xff]
  %v107 = vld [vmem:[%s0 + $0x300] sm:$0xff]
  %v108 = vld [vmem:[%s0 + $0x308] sm:$0xff]
  %v109 = vld [vmem:[%s0 + $0x310] sm:$0xff]
  %v110 = vld [vmem:[%s0 + $0x318] sm:$0xff]
  %v111 = vld [vmem:[%s0 + $0x320] sm:$0xff]
  %v112 = vld [vmem:[%s0 + $0x328] sm:$0xff]
  %v113 = vld [vmem:[%s0 + $0x330] sm:$0xff]
  %v114 = vld [vmem:[%s0 + $0x338] sm:$0xff]
  %v115 = vld [vmem:[%s0 + $0x340] sm:$0xff]
  %v116 = vld [vmem:[%s0 + $0x348] sm:$0xff]
  %v117 = vld [vmem:[%s0 + $0x350] sm:$0xff]
  %v118 = vld [vmem:[%s0 + $0x358] sm:$0xff]
  %v119 = vld [vmem:[%s0 + $0x360] sm:$0xff]
  %v120 = vld [vmem:[%s0 + $0x368] sm:$0xff]
  %v121 = vld [vmem:[%s0 + $0x370] sm:$0xff]
  %v122 = vld [vmem:[%s0 + $0x378] sm:$0xff]
  %v123 = vld [vmem:[%s0 + $0x380] sm:$0xff]
  %v124 = vld [vmem:[%s0 + $0x388] sm:$0xff]
  %v125 = vld [vmem:[%s0 + $0x390] sm:$0xff]
  %v126 = vld [vmem:[%s0 + $0x398] sm:$0xff]
  %v127 = vld [vmem:[%s0 + $0x3a0] sm:$0xff]
  %v128 = vld [vmem:[%s0 + $0x3a8] sm:$0xff]
  %v129 = vld [vmem:[%s0 + $0x3b0] sm:$0xff]
  %v130 = vld [vmem:[%s0 + $0x3b8] sm:$0xff]
  %v131 = vld [vmem:[%s0 + $0x3c0] sm:$0xff]
  %v132 = vld [vmem:[%s0 + $0x3c8] sm:$0xff]
  %v133 = vld [vmem:[%s0 + $0x3d0] sm:$0xff]
  %v134 = vld [vmem:[%s0 + $0x3d8] sm:$0xff]
  %v135 = vld [vmem:[%s0 + $0x3e0] sm:$0xff]
  %v136 = vld [vmem:[%s0 + $0x3e8] sm:$0xff]
  %v137 = vld [vmem:[%s0 + $0x3f0] sm:$0xff]
  %v138 = vld [vmem:[%s0 + $0x3f8] sm:$0xff]
  %v139 = vld [vmem:[%s1] sm:$0x7]
  %141 = vset.pattern.permute.xlu0 0
  %142 = vperm.xlu0 %141, %v11
  %v143 = vpop.permute.xlu0 %142
  %146 = vset.pattern.permute.xlu0 0
  %147 = vperm.xlu0 %146, %v12
  %v148 = vpop.permute.xlu0 %147
  %151 = vset.pattern.permute.xlu0 0
  %152 = vperm.xlu0 %151, %v13
  %v153 = vpop.permute.xlu0 %152
  %156 = vset.pattern.permute.xlu0 0
  %157 = vperm.xlu0 %156, %v14
  %v158 = vpop.permute.xlu0 %157
  %161 = vset.pattern.permute.xlu0 0
  %162 = vperm.xlu0 %161, %v15
  %v163 = vpop.permute.xlu0 %162
  %166 = vset.pattern.permute.xlu0 0
  %167 = vperm.xlu0 %166, %v16
  %v168 = vpop.permute.xlu0 %167
  %171 = vset.pattern.permute.xlu0 0
  %172 = vperm.xlu0 %171, %v17
  %v173 = vpop.permute.xlu0 %172
  %176 = vset.pattern.permute.xlu0 0
  %177 = vperm.xlu0 %176, %v18
  %v178 = vpop.permute.xlu0 %177
  %181 = vset.pattern.permute.xlu0 0
  %182 = vperm.xlu0 %181, %v19
  %v183 = vpop.permute.xlu0 %182
  %186 = vset.pattern.permute.xlu0 0
  %187 = vperm.xlu0 %186, %v20
  %v188 = vpop.permute.xlu0 %187
  %191 = vset.pattern.permute.xlu0 0
  %192 = vperm.xlu0 %191, %v21
  %v193 = vpop.permute.xlu0 %192
  %196 = vset.pattern.permute.xlu0 0
  %197 = vperm.xlu0 %196, %v22
  %v198 = vpop.permute.xlu0 %197
  %201 = vset.pattern.permute.xlu0 0
  %202 = vperm.xlu0 %201, %v23
  %v203 = vpop.permute.xlu0 %202
  %206 = vset.pattern.permute.xlu0 0
  %207 = vperm.xlu0 %206, %v24
  %v208 = vpop.permute.xlu0 %207
  %211 = vset.pattern.permute.xlu0 0
  %212 = vperm.xlu0 %211, %v25
  %v213 = vpop.permute.xlu0 %212
  %216 = vset.pattern.permute.xlu0 0
  %217 = vperm.xlu0 %216, %v26
  %v218 = vpop.permute.xlu0 %217
  %221 = vset.pattern.permute.xlu0 0
  %222 = vperm.xlu0 %221, %v27
  %v223 = vpop.permute.xlu0 %222
  %226 = vset.pattern.permute.xlu0 0
  %227 = vperm.xlu0 %226, %v28
  %v228 = vpop.permute.xlu0 %227
  %231 = vset.pattern.permute.xlu0 0
  %232 = vperm.xlu0 %231, %v29
  %v233 = vpop.permute.xlu0 %232
  %236 = vset.pattern.permute.xlu0 0
  %237 = vperm.xlu0 %236, %v30
  %v238 = vpop.permute.xlu0 %237
  %241 = vset.pattern.permute.xlu0 0
  %242 = vperm.xlu0 %241, %v31
  %v243 = vpop.permute.xlu0 %242
  %246 = vset.pattern.permute.xlu0 0
  %247 = vperm.xlu0 %246, %v32
  %v248 = vpop.permute.xlu0 %247
  %251 = vset.pattern.permute.xlu0 0
  %252 = vperm.xlu0 %251, %v33
  %v253 = vpop.permute.xlu0 %252
  %256 = vset.pattern.permute.xlu0 0
  %257 = vperm.xlu0 %256, %v34
  %v258 = vpop.permute.xlu0 %257
  %261 = vset.pattern.permute.xlu0 0
  %262 = vperm.xlu0 %261, %v35
  %v263 = vpop.permute.xlu0 %262
  %266 = vset.pattern.permute.xlu0 0
  %267 = vperm.xlu0 %266, %v36
  %v268 = vpop.permute.xlu0 %267
  %271 = vset.pattern.permute.xlu0 0
  %272 = vperm.xlu0 %271, %v37
  %v273 = vpop.permute.xlu0 %272
  %276 = vset.pattern.permute.xlu0 0
  %277 = vperm.xlu0 %276, %v38
  %v278 = vpop.permute.xlu0 %277
  %281 = vset.pattern.permute.xlu0 0
  %282 = vperm.xlu0 %281, %v39
  %v283 = vpop.permute.xlu0 %282
  %286 = vset.pattern.permute.xlu0 0
  %287 = vperm.xlu0 %286, %v40
  %v288 = vpop.permute.xlu0 %287
  %291 = vset.pattern.permute.xlu0 0
  %292 = vperm.xlu0 %291, %v41
  %v293 = vpop.permute.xlu0 %292
  %296 = vset.pattern.permute.xlu0 0
  %297 = vperm.xlu0 %296, %v42
  %v298 = vpop.permute.xlu0 %297
  %301 = vset.pattern.permute.xlu0 0
  %302 = vperm.xlu0 %301, %v43
  %v303 = vpop.permute.xlu0 %302
  %306 = vset.pattern.permute.xlu0 0
  %307 = vperm.xlu0 %306, %v44
  %v308 = vpop.permute.xlu0 %307
  %311 = vset.pattern.permute.xlu0 0
  %312 = vperm.xlu0 %311, %v45
  %v313 = vpop.permute.xlu0 %312
  %316 = vset.pattern.permute.xlu0 0
  %317 = vperm.xlu0 %316, %v46
  %v318 = vpop.permute.xlu0 %317
  %321 = vset.pattern.permute.xlu0 0
  %322 = vperm.xlu0 %321, %v47
  %v323 = vpop.permute.xlu0 %322
  %326 = vset.pattern.permute.xlu0 0
  %327 = vperm.xlu0 %326, %v48
  %v328 = vpop.permute.xlu0 %327
  %331 = vset.pattern.permute.xlu0 0
  %332 = vperm.xlu0 %331, %v49
  %v333 = vpop.permute.xlu0 %332
  %336 = vset.pattern.permute.xlu0 0
  %337 = vperm.xlu0 %336, %v50
  %v338 = vpop.permute.xlu0 %337
  %341 = vset.pattern.permute.xlu0 0
  %342 = vperm.xlu0 %341, %v51
  %v343 = vpop.permute.xlu0 %342
  %346 = vset.pattern.permute.xlu0 0
  %347 = vperm.xlu0 %346, %v52
  %v348 = vpop.permute.xlu0 %347
  %351 = vset.pattern.permute.xlu0 0
  %352 = vperm.xlu0 %351, %v53
  %v353 = vpop.permute.xlu0 %352
  %356 = vset.pattern.permute.xlu0 0
  %357 = vperm.xlu0 %356, %v54
  %v358 = vpop.permute.xlu0 %357
  %361 = vset.pattern.permute.xlu0 0
  %362 = vperm.xlu0 %361, %v55
  %v363 = vpop.permute.xlu0 %362
  %366 = vset.pattern.permute.xlu0 0
  %367 = vperm.xlu0 %366, %v56
  %v368 = vpop.permute.xlu0 %367
  %371 = vset.pattern.permute.xlu0 0
  %372 = vperm.xlu0 %371, %v57
  %v373 = vpop.permute.xlu0 %372
  %376 = vset.pattern.permute.xlu0 0
  %377 = vperm.xlu0 %376, %v58
  %v378 = vpop.permute.xlu0 %377
  %381 = vset.pattern.permute.xlu0 0
  %382 = vperm.xlu0 %381, %v59
  %v383 = vpop.permute.xlu0 %382
  %386 = vset.pattern.permute.xlu0 0
  %387 = vperm.xlu0 %386, %v60
  %v388 = vpop.permute.xlu0 %387
  %391 = vset.pattern.permute.xlu0 0
  %392 = vperm.xlu0 %391, %v61
  %v393 = vpop.permute.xlu0 %392
  %396 = vset.pattern.permute.xlu0 0
  %397 = vperm.xlu0 %396, %v62
  %v398 = vpop.permute.xlu0 %397
  %401 = vset.pattern.permute.xlu0 0
  %402 = vperm.xlu0 %401, %v63
  %v403 = vpop.permute.xlu0 %402
  %406 = vset.pattern.permute.xlu0 0
  %407 = vperm.xlu0 %406, %v64
  %v408 = vpop.permute.xlu0 %407
  %411 = vset.pattern.permute.xlu0 0
  %412 = vperm.xlu0 %411, %v65
  %v413 = vpop.permute.xlu0 %412
  %416 = vset.pattern.permute.xlu0 0
  %417 = vperm.xlu0 %416, %v66
  %v418 = vpop.permute.xlu0 %417
  %421 = vset.pattern.permute.xlu0 0
  %422 = vperm.xlu0 %421, %v67
  %v423 = vpop.permute.xlu0 %422
  %426 = vset.pattern.permute.xlu0 0
  %427 = vperm.xlu0 %426, %v68
  %v428 = vpop.permute.xlu0 %427
  %431 = vset.pattern.permute.xlu0 0
  %432 = vperm.xlu0 %431, %v69
  %v433 = vpop.permute.xlu0 %432
  %436 = vset.pattern.permute.xlu0 0
  %437 = vperm.xlu0 %436, %v70
  %v438 = vpop.permute.xlu0 %437
  %441 = vset.pattern.permute.xlu0 0
  %442 = vperm.xlu0 %441, %v71
  %v443 = vpop.permute.xlu0 %442
  %446 = vset.pattern.permute.xlu0 0
  %447 = vperm.xlu0 %446, %v72
  %v448 = vpop.permute.xlu0 %447
  %451 = vset.pattern.permute.xlu0 0
  %452 = vperm.xlu0 %451, %v73
  %v453 = vpop.permute.xlu0 %452
  %456 = vset.pattern.permute.xlu0 0
  %457 = vperm.xlu0 %456, %v74
  %v458 = vpop.permute.xlu0 %457
  %461 = vset.pattern.permute.xlu0 0
  %462 = vperm.xlu0 %461, %v75
  %v463 = vpop.permute.xlu0 %462
  %466 = vset.pattern.permute.xlu0 0
  %467 = vperm.xlu0 %466, %v76
  %v468 = vpop.permute.xlu0 %467
  %471 = vset.pattern.permute.xlu0 0
  %472 = vperm.xlu0 %471, %v77
  %v473 = vpop.permute.xlu0 %472
  %476 = vset.pattern.permute.xlu0 0
  %477 = vperm.xlu0 %476, %v78
  %v478 = vpop.permute.xlu0 %477
  %481 = vset.pattern.permute.xlu0 0
  %482 = vperm.xlu0 %481, %v79
  %v483 = vpop.permute.xlu0 %482
  %486 = vset.pattern.permute.xlu0 0
  %487 = vperm.xlu0 %486, %v80
  %v488 = vpop.permute.xlu0 %487
  %491 = vset.pattern.permute.xlu0 0
  %492 = vperm.xlu0 %491, %v81
  %v493 = vpop.permute.xlu0 %492
  %496 = vset.pattern.permute.xlu0 0
  %497 = vperm.xlu0 %496, %v82
  %v498 = vpop.permute.xlu0 %497
  %501 = vset.pattern.permute.xlu0 0
  %502 = vperm.xlu0 %501, %v83
  %v503 = vpop.permute.xlu0 %502
  %506 = vset.pattern.permute.xlu0 0
  %507 = vperm.xlu0 %506, %v84
  %v508 = vpop.permute.xlu0 %507
  %511 = vset.pattern.permute.xlu0 0
  %512 = vperm.xlu0 %511, %v85
  %v513 = vpop.permute.xlu0 %512
  %516 = vset.pattern.permute.xlu0 0
  %517 = vperm.xlu0 %516, %v86
  %v518 = vpop.permute.xlu0 %517
  %521 = vset.pattern.permute.xlu0 0
  %522 = vperm.xlu0 %521, %v87
  %v523 = vpop.permute.xlu0 %522
  %526 = vset.pattern.permute.xlu0 0
  %527 = vperm.xlu0 %526, %v88
  %v528 = vpop.permute.xlu0 %527
  %531 = vset.pattern.permute.xlu0 0
  %532 = vperm.xlu0 %531, %v89
  %v533 = vpop.permute.xlu0 %532
  %536 = vset.pattern.permute.xlu0 0
  %537 = vperm.xlu0 %536, %v90
  %v538 = vpop.permute.xlu0 %537
  %541 = vset.pattern.permute.xlu0 0
  %542 = vperm.xlu0 %541, %v91
  %v543 = vpop.permute.xlu0 %542
  %546 = vset.pattern.permute.xlu0 0
  %547 = vperm.xlu0 %546, %v92
  %v548 = vpop.permute.xlu0 %547
  %551 = vset.pattern.permute.xlu0 0
  %552 = vperm.xlu0 %551, %v93
  %v553 = vpop.permute.xlu0 %552
  %556 = vset.pattern.permute.xlu0 0
  %557 = vperm.xlu0 %556, %v94
  %v558 = vpop.permute.xlu0 %557
  %561 = vset.pattern.permute.xlu0 0
  %562 = vperm.xlu0 %561, %v95
  %v563 = vpop.permute.xlu0 %562
  %566 = vset.pattern.permute.xlu0 0
  %567 = vperm.xlu0 %566, %v96
  %v568 = vpop.permute.xlu0 %567
  %571 = vset.pattern.permute.xlu0 0
  %572 = vperm.xlu0 %571, %v97
  %v573 = vpop.permute.xlu0 %572
  %576 = vset.pattern.permute.xlu0 0
  %577 = vperm.xlu0 %576, %v98
  %v578 = vpop.permute.xlu0 %577
  %581 = vset.pattern.permute.xlu0 0
  %582 = vperm.xlu0 %581, %v99
  %v583 = vpop.permute.xlu0 %582
  %586 = vset.pattern.permute.xlu0 0
  %587 = vperm.xlu0 %586, %v100
  %v588 = vpop.permute.xlu0 %587
  %591 = vset.pattern.permute.xlu0 0
  %592 = vperm.xlu0 %591, %v101
  %v593 = vpop.permute.xlu0 %592
  %596 = vset.pattern.permute.xlu0 0
  %597 = vperm.xlu0 %596, %v102
  %v598 = vpop.permute.xlu0 %597
  %601 = vset.pattern.permute.xlu0 0
  %602 = vperm.xlu0 %601, %v103
  %v603 = vpop.permute.xlu0 %602
  %606 = vset.pattern.permute.xlu0 0
  %607 = vperm.xlu0 %606, %v104
  %v608 = vpop.permute.xlu0 %607
  %611 = vset.pattern.permute.xlu0 0
  %612 = vperm.xlu0 %611, %v105
  %v613 = vpop.permute.xlu0 %612
  %616 = vset.pattern.permute.xlu0 0
  %617 = vperm.xlu0 %616, %v106
  %v618 = vpop.permute.xlu0 %617
  %621 = vset.pattern.permute.xlu0 0
  %622 = vperm.xlu0 %621, %v107
  %v623 = vpop.permute.xlu0 %622
  %626 = vset.pattern.permute.xlu0 0
  %627 = vperm.xlu0 %626, %v108
  %v628 = vpop.permute.xlu0 %627
  %631 = vset.pattern.permute.xlu0 0
  %632 = vperm.xlu0 %631, %v109
  %v633 = vpop.permute.xlu0 %632
  %636 = vset.pattern.permute.xlu0 0
  %637 = vperm.xlu0 %636, %v110
  %v638 = vpop.permute.xlu0 %637
  %641 = vset.pattern.permute.xlu0 0
  %642 = vperm.xlu0 %641, %v111
  %v643 = vpop.permute.xlu0 %642
  %646 = vset.pattern.permute.xlu0 0
  %647 = vperm.xlu0 %646, %v112
  %v648 = vpop.permute.xlu0 %647
  %651 = vset.pattern.permute.xlu0 0
  %652 = vperm.xlu0 %651, %v113
  %v653 = vpop.permute.xlu0 %652
  %656 = vset.pattern.permute.xlu0 0
  %657 = vperm.xlu0 %656, %v114
  %v658 = vpop.permute.xlu0 %657
  %661 = vset.pattern.permute.xlu0 0
  %662 = vperm.xlu0 %661, %v115
  %v663 = vpop.permute.xlu0 %662
  %666 = vset.pattern.permute.xlu0 0
  %667 = vperm.xlu0 %666, %v116
  %v668 = vpop.permute.xlu0 %667
  %671 = vset.pattern.permute.xlu0 0
  %672 = vperm.xlu0 %671, %v117
  %v673 = vpop.permute.xlu0 %672
  %676 = vset.pattern.permute.xlu0 0
  %677 = vperm.xlu0 %676, %v118
  %v678 = vpop.permute.xlu0 %677
  %681 = vset.pattern.permute.xlu0 0
  %682 = vperm.xlu0 %681, %v119
  %v683 = vpop.permute.xlu0 %682
  %686 = vset.pattern.permute.xlu0 0
  %687 = vperm.xlu0 %686, %v120
  %v688 = vpop.permute.xlu0 %687
  %691 = vset.pattern.permute.xlu0 0
  %692 = vperm.xlu0 %691, %v121
  %v693 = vpop.permute.xlu0 %692
  %696 = vset.pattern.permute.xlu0 0
  %697 = vperm.xlu0 %696, %v122
  %v698 = vpop.permute.xlu0 %697
  %701 = vset.pattern.permute.xlu0 0
  %702 = vperm.xlu0 %701, %v123
  %v703 = vpop.permute.xlu0 %702
  %706 = vset.pattern.permute.xlu0 0
  %707 = vperm.xlu0 %706, %v124
  %v708 = vpop.permute.xlu0 %707
  %711 = vset.pattern.permute.xlu0 0
  %712 = vperm.xlu0 %711, %v125
  %v713 = vpop.permute.xlu0 %712
  %716 = vset.pattern.permute.xlu0 0
  %717 = vperm.xlu0 %716, %v126
  %v718 = vpop.permute.xlu0 %717
  %721 = vset.pattern.permute.xlu0 0
  %722 = vperm.xlu0 %721, %v127
  %v723 = vpop.permute.xlu0 %722
  %726 = vset.pattern.permute.xlu0 0
  %727 = vperm.xlu0 %726, %v128
  %v728 = vpop.permute.xlu0 %727
  %731 = vset.pattern.permute.xlu0 0
  %732 = vperm.xlu0 %731, %v129
  %v733 = vpop.permute.xlu0 %732
  %736 = vset.pattern.permute.xlu0 0
  %737 = vperm.xlu0 %736, %v130
  %v738 = vpop.permute.xlu0 %737
  %741 = vset.pattern.permute.xlu0 0
  %742 = vperm.xlu0 %741, %v131
  %v743 = vpop.permute.xlu0 %742
  %746 = vset.pattern.permute.xlu0 0
  %747 = vperm.xlu0 %746, %v132
  %v748 = vpop.permute.xlu0 %747
  %751 = vset.pattern.permute.xlu0 0
  %752 = vperm.xlu0 %751, %v133
  %v753 = vpop.permute.xlu0 %752
  %756 = vset.pattern.permute.xlu0 0
  %757 = vperm.xlu0 %756, %v134
  %v758 = vpop.permute.xlu0 %757
  %761 = vset.pattern.permute.xlu0 0
  %762 = vperm.xlu0 %761, %v135
  %v763 = vpop.permute.xlu0 %762
  %766 = vset.pattern.permute.xlu0 0
  %767 = vperm.xlu0 %766, %v136
  %v768 = vpop.permute.xlu0 %767
  %771 = vset.pattern.permute.xlu0 0
  %772 = vperm.xlu0 %771, %v137
  %v773 = vpop.permute.xlu0 %772
  %776 = vset.pattern.permute.xlu0 0
  %777 = vperm.xlu0 %776, %v138
  %v778 = vpop.permute.xlu0 %777
  %v780 = vperm.slane %v139, 0
  %v781 = vmul.f32 %v143, %v780
  %v782 = vmul.f32 %v148, %v780
  %v783 = vmul.f32 %v153, %v780
  %v784 = vmul.f32 %v158, %v780
  %v785 = vmul.f32 %v163, %v780
  %v786 = vmul.f32 %v168, %v780
  %v787 = vmul.f32 %v173, %v780
  %v788 = vmul.f32 %v178, %v780
  %v789 = vmul.f32 %v183, %v780
  %v790 = vmul.f32 %v188, %v780
  %v791 = vmul.f32 %v193, %v780
  %v792 = vmul.f32 %v198, %v780
  %v793 = vmul.f32 %v203, %v780
  %v794 = vmul.f32 %v208, %v780
  %v795 = vmul.f32 %v213, %v780
  %v796 = vmul.f32 %v218, %v780
  %v797 = vmul.f32 %v223, %v780
  %v798 = vmul.f32 %v228, %v780
  %v799 = vmul.f32 %v233, %v780
  %v800 = vmul.f32 %v238, %v780
  %v801 = vmul.f32 %v243, %v780
  %v802 = vmul.f32 %v248, %v780
  %v803 = vmul.f32 %v253, %v780
  %v804 = vmul.f32 %v258, %v780
  %v805 = vmul.f32 %v263, %v780
  %v806 = vmul.f32 %v268, %v780
  %v807 = vmul.f32 %v273, %v780
  %v808 = vmul.f32 %v278, %v780
  %v809 = vmul.f32 %v283, %v780
  %v810 = vmul.f32 %v288, %v780
  %v811 = vmul.f32 %v293, %v780
  %v812 = vmul.f32 %v298, %v780
  %v813 = vmul.f32 %v303, %v780
  %v814 = vmul.f32 %v308, %v780
  %v815 = vmul.f32 %v313, %v780
  %v816 = vmul.f32 %v318, %v780
  %v817 = vmul.f32 %v323, %v780
  %v818 = vmul.f32 %v328, %v780
  %v819 = vmul.f32 %v333, %v780
  %v820 = vmul.f32 %v338, %v780
  %v821 = vmul.f32 %v343, %v780
  %v822 = vmul.f32 %v348, %v780
  %v823 = vmul.f32 %v353, %v780
  %v824 = vmul.f32 %v358, %v780
  %v825 = vmul.f32 %v363, %v780
  %v826 = vmul.f32 %v368, %v780
  %v827 = vmul.f32 %v373, %v780
  %v828 = vmul.f32 %v378, %v780
  %v829 = vmul.f32 %v383, %v780
  %v830 = vmul.f32 %v388, %v780
  %v831 = vmul.f32 %v393, %v780
  %v832 = vmul.f32 %v398, %v780
  %v833 = vmul.f32 %v403, %v780
  %v834 = vmul.f32 %v408, %v780
  %v835 = vmul.f32 %v413, %v780
  %v836 = vmul.f32 %v418, %v780
  %v837 = vmul.f32 %v423, %v780
  %v838 = vmul.f32 %v428, %v780
  %v839 = vmul.f32 %v433, %v780
  %v840 = vmul.f32 %v438, %v780
  %v841 = vmul.f32 %v443, %v780
  %v842 = vmul.f32 %v448, %v780
  %v843 = vmul.f32 %v453, %v780
  %v844 = vmul.f32 %v458, %v780
  %v845 = vmul.f32 %v463, %v780
  %v846 = vmul.f32 %v468, %v780
  %v847 = vmul.f32 %v473, %v780
  %v848 = vmul.f32 %v478, %v780
  %v849 = vmul.f32 %v483, %v780
  %v850 = vmul.f32 %v488, %v780
  %v851 = vmul.f32 %v493, %v780
  %v852 = vmul.f32 %v498, %v780
  %v853 = vmul.f32 %v503, %v780
  %v854 = vmul.f32 %v508, %v780
  %v855 = vmul.f32 %v513, %v780
  %v856 = vmul.f32 %v518, %v780
  %v857 = vmul.f32 %v523, %v780
  %v858 = vmul.f32 %v528, %v780
  %v859 = vmul.f32 %v533, %v780
  %v860 = vmul.f32 %v538, %v780
  %v861 = vmul.f32 %v543, %v780
  %v862 = vmul.f32 %v548, %v780
  %v863 = vmul.f32 %v553, %v780
  %v864 = vmul.f32 %v558, %v780
  %v865 = vmul.f32 %v563, %v780
  %v866 = vmul.f32 %v568, %v780
  %v867 = vmul.f32 %v573, %v780
  %v868 = vmul.f32 %v578, %v780
  %v869 = vmul.f32 %v583, %v780
  %v870 = vmul.f32 %v588, %v780
  %v871 = vmul.f32 %v593, %v780
  %v872 = vmul.f32 %v598, %v780
  %v873 = vmul.f32 %v603, %v780
  %v874 = vmul.f32 %v608, %v780
  %v875 = vmul.f32 %v613, %v780
  %v876 = vmul.f32 %v618, %v780
  %v877 = vmul.f32 %v623, %v780
  %v878 = vmul.f32 %v628, %v780
  %v879 = vmul.f32 %v633, %v780
  %v880 = vmul.f32 %v638, %v780
  %v881 = vmul.f32 %v643, %v780
  %v882 = vmul.f32 %v648, %v780
  %v883 = vmul.f32 %v653, %v780
  %v884 = vmul.f32 %v658, %v780
  %v885 = vmul.f32 %v663, %v780
  %v886 = vmul.f32 %v668, %v780
  %v887 = vmul.f32 %v673, %v780
  %v888 = vmul.f32 %v678, %v780
  %v889 = vmul.f32 %v683, %v780
  %v890 = vmul.f32 %v688, %v780
  %v891 = vmul.f32 %v693, %v780
  %v892 = vmul.f32 %v698, %v780
  %v893 = vmul.f32 %v703, %v780
  %v894 = vmul.f32 %v708, %v780
  %v895 = vmul.f32 %v713, %v780
  %v896 = vmul.f32 %v718, %v780
  %v897 = vmul.f32 %v723, %v780
  %v898 = vmul.f32 %v728, %v780
  %v899 = vmul.f32 %v733, %v780
  %v900 = vmul.f32 %v738, %v780
  %v901 = vmul.f32 %v743, %v780
  %v902 = vmul.f32 %v748, %v780
  %v903 = vmul.f32 %v753, %v780
  %v904 = vmul.f32 %v758, %v780
  %v905 = vmul.f32 %v763, %v780
  %v906 = vmul.f32 %v768, %v780
  %v907 = vmul.f32 %v773, %v780
  %v908 = vmul.f32 %v778, %v780
  %909 = vset.pattern.permute.xlu0 1
  %910 = vperm.xlu0 %909, %v11
  %v911 = vpop.permute.xlu0 %910
  %913 = vset.pattern.permute.xlu0 1
  %914 = vperm.xlu0 %913, %v12
  %v915 = vpop.permute.xlu0 %914
  %917 = vset.pattern.permute.xlu0 1
  %918 = vperm.xlu0 %917, %v13
  %v919 = vpop.permute.xlu0 %918
  %921 = vset.pattern.permute.xlu0 1
  %922 = vperm.xlu0 %921, %v14
  %v923 = vpop.permute.xlu0 %922
  %925 = vset.pattern.permute.xlu0 1
  %926 = vperm.xlu0 %925, %v15
  %v927 = vpop.permute.xlu0 %926
  %929 = vset.pattern.permute.xlu0 1
  %930 = vperm.xlu0 %929, %v16
  %v931 = vpop.permute.xlu0 %930
  %933 = vset.pattern.permute.xlu0 1
  %934 = vperm.xlu0 %933, %v17
  %v935 = vpop.permute.xlu0 %934
  %937 = vset.pattern.permute.xlu0 1
  %938 = vperm.xlu0 %937, %v18
  %v939 = vpop.permute.xlu0 %938
  %941 = vset.pattern.permute.xlu0 1
  %942 = vperm.xlu0 %941, %v19
  %v943 = vpop.permute.xlu0 %942
  %945 = vset.pattern.permute.xlu0 1
  %946 = vperm.xlu0 %945, %v20
  %v947 = vpop.permute.xlu0 %946
  %949 = vset.pattern.permute.xlu0 1
  %950 = vperm.xlu0 %949, %v21
  %v951 = vpop.permute.xlu0 %950
  %953 = vset.pattern.permute.xlu0 1
  %954 = vperm.xlu0 %953, %v22
  %v955 = vpop.permute.xlu0 %954
  %957 = vset.pattern.permute.xlu0 1
  %958 = vperm.xlu0 %957, %v23
  %v959 = vpop.permute.xlu0 %958
  %961 = vset.pattern.permute.xlu0 1
  %962 = vperm.xlu0 %961, %v24
  %v963 = vpop.permute.xlu0 %962
  %965 = vset.pattern.permute.xlu0 1
  %966 = vperm.xlu0 %965, %v25
  %v967 = vpop.permute.xlu0 %966
  %969 = vset.pattern.permute.xlu0 1
  %970 = vperm.xlu0 %969, %v26
  %v971 = vpop.permute.xlu0 %970
  %973 = vset.pattern.permute.xlu0 1
  %974 = vperm.xlu0 %973, %v27
  %v975 = vpop.permute.xlu0 %974
  %977 = vset.pattern.permute.xlu0 1
  %978 = vperm.xlu0 %977, %v28
  %v979 = vpop.permute.xlu0 %978
  %981 = vset.pattern.permute.xlu0 1
  %982 = vperm.xlu0 %981, %v29
  %v983 = vpop.permute.xlu0 %982
  %985 = vset.pattern.permute.xlu0 1
  %986 = vperm.xlu0 %985, %v30
  %v987 = vpop.permute.xlu0 %986
  %989 = vset.pattern.permute.xlu0 1
  %990 = vperm.xlu0 %989, %v31
  %v991 = vpop.permute.xlu0 %990
  %993 = vset.pattern.permute.xlu0 1
  %994 = vperm.xlu0 %993, %v32
  %v995 = vpop.permute.xlu0 %994
  %997 = vset.pattern.permute.xlu0 1
  %998 = vperm.xlu0 %997, %v33
  %v999 = vpop.permute.xlu0 %998
  %1001 = vset.pattern.permute.xlu0 1
  %1002 = vperm.xlu0 %1001, %v34
  %v1003 = vpop.permute.xlu0 %1002
  %1005 = vset.pattern.permute.xlu0 1
  %1006 = vperm.xlu0 %1005, %v35
  %v1007 = vpop.permute.xlu0 %1006
  %1009 = vset.pattern.permute.xlu0 1
  %1010 = vperm.xlu0 %1009, %v36
  %v1011 = vpop.permute.xlu0 %1010
  %1013 = vset.pattern.permute.xlu0 1
  %1014 = vperm.xlu0 %1013, %v37
  %v1015 = vpop.permute.xlu0 %1014
  %1017 = vset.pattern.permute.xlu0 1
  %1018 = vperm.xlu0 %1017, %v38
  %v1019 = vpop.permute.xlu0 %1018
  %1021 = vset.pattern.permute.xlu0 1
  %1022 = vperm.xlu0 %1021, %v39
  %v1023 = vpop.permute.xlu0 %1022
  %1025 = vset.pattern.permute.xlu0 1
  %1026 = vperm.xlu0 %1025, %v40
  %v1027 = vpop.permute.xlu0 %1026
  %1029 = vset.pattern.permute.xlu0 1
  %1030 = vperm.xlu0 %1029, %v41
  %v1031 = vpop.permute.xlu0 %1030
  %1033 = vset.pattern.permute.xlu0 1
  %1034 = vperm.xlu0 %1033, %v42
  %v1035 = vpop.permute.xlu0 %1034
  %1037 = vset.pattern.permute.xlu0 1
  %1038 = vperm.xlu0 %1037, %v43
  %v1039 = vpop.permute.xlu0 %1038
  %1041 = vset.pattern.permute.xlu0 1
  %1042 = vperm.xlu0 %1041, %v44
  %v1043 = vpop.permute.xlu0 %1042
  %1045 = vset.pattern.permute.xlu0 1
  %1046 = vperm.xlu0 %1045, %v45
  %v1047 = vpop.permute.xlu0 %1046
  %1049 = vset.pattern.permute.xlu0 1
  %1050 = vperm.xlu0 %1049, %v46
  %v1051 = vpop.permute.xlu0 %1050
  %1053 = vset.pattern.permute.xlu0 1
  %1054 = vperm.xlu0 %1053, %v47
  %v1055 = vpop.permute.xlu0 %1054
  %1057 = vset.pattern.permute.xlu0 1
  %1058 = vperm.xlu0 %1057, %v48
  %v1059 = vpop.permute.xlu0 %1058
  %1061 = vset.pattern.permute.xlu0 1
  %1062 = vperm.xlu0 %1061, %v49
  %v1063 = vpop.permute.xlu0 %1062
  %1065 = vset.pattern.permute.xlu0 1
  %1066 = vperm.xlu0 %1065, %v50
  %v1067 = vpop.permute.xlu0 %1066
  %1069 = vset.pattern.permute.xlu0 1
  %1070 = vperm.xlu0 %1069, %v51
  %v1071 = vpop.permute.xlu0 %1070
  %1073 = vset.pattern.permute.xlu0 1
  %1074 = vperm.xlu0 %1073, %v52
  %v1075 = vpop.permute.xlu0 %1074
  %1077 = vset.pattern.permute.xlu0 1
  %1078 = vperm.xlu0 %1077, %v53
  %v1079 = vpop.permute.xlu0 %1078
  %1081 = vset.pattern.permute.xlu0 1
  %1082 = vperm.xlu0 %1081, %v54
  %v1083 = vpop.permute.xlu0 %1082
  %1085 = vset.pattern.permute.xlu0 1
  %1086 = vperm.xlu0 %1085, %v55
  %v1087 = vpop.permute.xlu0 %1086
  %1089 = vset.pattern.permute.xlu0 1
  %1090 = vperm.xlu0 %1089, %v56
  %v1091 = vpop.permute.xlu0 %1090
  %1093 = vset.pattern.permute.xlu0 1
  %1094 = vperm.xlu0 %1093, %v57
  %v1095 = vpop.permute.xlu0 %1094
  %1097 = vset.pattern.permute.xlu0 1
  %1098 = vperm.xlu0 %1097, %v58
  %v1099 = vpop.permute.xlu0 %1098
  %1101 = vset.pattern.permute.xlu0 1
  %1102 = vperm.xlu0 %1101, %v59
  %v1103 = vpop.permute.xlu0 %1102
  %1105 = vset.pattern.permute.xlu0 1
  %1106 = vperm.xlu0 %1105, %v60
  %v1107 = vpop.permute.xlu0 %1106
  %1109 = vset.pattern.permute.xlu0 1
  %1110 = vperm.xlu0 %1109, %v61
  %v1111 = vpop.permute.xlu0 %1110
  %1113 = vset.pattern.permute.xlu0 1
  %1114 = vperm.xlu0 %1113, %v62
  %v1115 = vpop.permute.xlu0 %1114
  %1117 = vset.pattern.permute.xlu0 1
  %1118 = vperm.xlu0 %1117, %v63
  %v1119 = vpop.permute.xlu0 %1118
  %1121 = vset.pattern.permute.xlu0 1
  %1122 = vperm.xlu0 %1121, %v64
  %v1123 = vpop.permute.xlu0 %1122
  %1125 = vset.pattern.permute.xlu0 1
  %1126 = vperm.xlu0 %1125, %v65
  %v1127 = vpop.permute.xlu0 %1126
  %1129 = vset.pattern.permute.xlu0 1
  %1130 = vperm.xlu0 %1129, %v66
  %v1131 = vpop.permute.xlu0 %1130
  %1133 = vset.pattern.permute.xlu0 1
  %1134 = vperm.xlu0 %1133, %v67
  %v1135 = vpop.permute.xlu0 %1134
  %1137 = vset.pattern.permute.xlu0 1
  %1138 = vperm.xlu0 %1137, %v68
  %v1139 = vpop.permute.xlu0 %1138
  %1141 = vset.pattern.permute.xlu0 1
  %1142 = vperm.xlu0 %1141, %v69
  %v1143 = vpop.permute.xlu0 %1142
  %1145 = vset.pattern.permute.xlu0 1
  %1146 = vperm.xlu0 %1145, %v70
  %v1147 = vpop.permute.xlu0 %1146
  %1149 = vset.pattern.permute.xlu0 1
  %1150 = vperm.xlu0 %1149, %v71
  %v1151 = vpop.permute.xlu0 %1150
  %1153 = vset.pattern.permute.xlu0 1
  %1154 = vperm.xlu0 %1153, %v72
  %v1155 = vpop.permute.xlu0 %1154
  %1157 = vset.pattern.permute.xlu0 1
  %1158 = vperm.xlu0 %1157, %v73
  %v1159 = vpop.permute.xlu0 %1158
  %1161 = vset.pattern.permute.xlu0 1
  %1162 = vperm.xlu0 %1161, %v74
  %v1163 = vpop.permute.xlu0 %1162
  %1165 = vset.pattern.permute.xlu0 1
  %1166 = vperm.xlu0 %1165, %v75
  %v1167 = vpop.permute.xlu0 %1166
  %1169 = vset.pattern.permute.xlu0 1
  %1170 = vperm.xlu0 %1169, %v76
  %v1171 = vpop.permute.xlu0 %1170
  %1173 = vset.pattern.permute.xlu0 1
  %1174 = vperm.xlu0 %1173, %v77
  %v1175 = vpop.permute.xlu0 %1174
  %1177 = vset.pattern.permute.xlu0 1
  %1178 = vperm.xlu0 %1177, %v78
  %v1179 = vpop.permute.xlu0 %1178
  %1181 = vset.pattern.permute.xlu0 1
  %1182 = vperm.xlu0 %1181, %v79
  %v1183 = vpop.permute.xlu0 %1182
  %1185 = vset.pattern.permute.xlu0 1
  %1186 = vperm.xlu0 %1185, %v80
  %v1187 = vpop.permute.xlu0 %1186
  %1189 = vset.pattern.permute.xlu0 1
  %1190 = vperm.xlu0 %1189, %v81
  %v1191 = vpop.permute.xlu0 %1190
  %1193 = vset.pattern.permute.xlu0 1
  %1194 = vperm.xlu0 %1193, %v82
  %v1195 = vpop.permute.xlu0 %1194
  %1197 = vset.pattern.permute.xlu0 1
  %1198 = vperm.xlu0 %1197, %v83
  %v1199 = vpop.permute.xlu0 %1198
  %1201 = vset.pattern.permute.xlu0 1
  %1202 = vperm.xlu0 %1201, %v84
  %v1203 = vpop.permute.xlu0 %1202
  %1205 = vset.pattern.permute.xlu0 1
  %1206 = vperm.xlu0 %1205, %v85
  %v1207 = vpop.permute.xlu0 %1206
  %1209 = vset.pattern.permute.xlu0 1
  %1210 = vperm.xlu0 %1209, %v86
  %v1211 = vpop.permute.xlu0 %1210
  %1213 = vset.pattern.permute.xlu0 1
  %1214 = vperm.xlu0 %1213, %v87
  %v1215 = vpop.permute.xlu0 %1214
  %1217 = vset.pattern.permute.xlu0 1
  %1218 = vperm.xlu0 %1217, %v88
  %v1219 = vpop.permute.xlu0 %1218
  %1221 = vset.pattern.permute.xlu0 1
  %1222 = vperm.xlu0 %1221, %v89
  %v1223 = vpop.permute.xlu0 %1222
  %1225 = vset.pattern.permute.xlu0 1
  %1226 = vperm.xlu0 %1225, %v90
  %v1227 = vpop.permute.xlu0 %1226
  %1229 = vset.pattern.permute.xlu0 1
  %1230 = vperm.xlu0 %1229, %v91
  %v1231 = vpop.permute.xlu0 %1230
  %1233 = vset.pattern.permute.xlu0 1
  %1234 = vperm.xlu0 %1233, %v92
  %v1235 = vpop.permute.xlu0 %1234
  %1237 = vset.pattern.permute.xlu0 1
  %1238 = vperm.xlu0 %1237, %v93
  %v1239 = vpop.permute.xlu0 %1238
  %1241 = vset.pattern.permute.xlu0 1
  %1242 = vperm.xlu0 %1241, %v94
  %v1243 = vpop.permute.xlu0 %1242
  %1245 = vset.pattern.permute.xlu0 1
  %1246 = vperm.xlu0 %1245, %v95
  %v1247 = vpop.permute.xlu0 %1246
  %1249 = vset.pattern.permute.xlu0 1
  %1250 = vperm.xlu0 %1249, %v96
  %v1251 = vpop.permute.xlu0 %1250
  %1253 = vset.pattern.permute.xlu0 1
  %1254 = vperm.xlu0 %1253, %v97
  %v1255 = vpop.permute.xlu0 %1254
  %1257 = vset.pattern.permute.xlu0 1
  %1258 = vperm.xlu0 %1257, %v98
  %v1259 = vpop.permute.xlu0 %1258
  %1261 = vset.pattern.permute.xlu0 1
  %1262 = vperm.xlu0 %1261, %v99
  %v1263 = vpop.permute.xlu0 %1262
  %1265 = vset.pattern.permute.xlu0 1
  %1266 = vperm.xlu0 %1265, %v100
  %v1267 = vpop.permute.xlu0 %1266
  %1269 = vset.pattern.permute.xlu0 1
  %1270 = vperm.xlu0 %1269, %v101
  %v1271 = vpop.permute.xlu0 %1270
  %1273 = vset.pattern.permute.xlu0 1
  %1274 = vperm.xlu0 %1273, %v102
  %v1275 = vpop.permute.xlu0 %1274
  %1277 = vset.pattern.permute.xlu0 1
  %1278 = vperm.xlu0 %1277, %v103
  %v1279 = vpop.permute.xlu0 %1278
  %1281 = vset.pattern.permute.xlu0 1
  %1282 = vperm.xlu0 %1281, %v104
  %v1283 = vpop.permute.xlu0 %1282
  %1285 = vset.pattern.permute.xlu0 1
  %1286 = vperm.xlu0 %1285, %v105
  %v1287 = vpop.permute.xlu0 %1286
  %1289 = vset.pattern.permute.xlu0 1
  %1290 = vperm.xlu0 %1289, %v106
  %v1291 = vpop.permute.xlu0 %1290
  %1293 = vset.pattern.permute.xlu0 1
  %1294 = vperm.xlu0 %1293, %v107
  %v1295 = vpop.permute.xlu0 %1294
  %1297 = vset.pattern.permute.xlu0 1
  %1298 = vperm.xlu0 %1297, %v108
  %v1299 = vpop.permute.xlu0 %1298
  %1301 = vset.pattern.permute.xlu0 1
  %1302 = vperm.xlu0 %1301, %v109
  %v1303 = vpop.permute.xlu0 %1302
  %1305 = vset.pattern.permute.xlu0 1
  %1306 = vperm.xlu0 %1305, %v110
  %v1307 = vpop.permute.xlu0 %1306
  %1309 = vset.pattern.permute.xlu0 1
  %1310 = vperm.xlu0 %1309, %v111
  %v1311 = vpop.permute.xlu0 %1310
  %1313 = vset.pattern.permute.xlu0 1
  %1314 = vperm.xlu0 %1313, %v112
  %v1315 = vpop.permute.xlu0 %1314
  %1317 = vset.pattern.permute.xlu0 1
  %1318 = vperm.xlu0 %1317, %v113
  %v1319 = vpop.permute.xlu0 %1318
  %1321 = vset.pattern.permute.xlu0 1
  %1322 = vperm.xlu0 %1321, %v114
  %v1323 = vpop.permute.xlu0 %1322
  %1325 = vset.pattern.permute.xlu0 1
  %1326 = vperm.xlu0 %1325, %v115
  %v1327 = vpop.permute.xlu0 %1326
  %1329 = vset.pattern.permute.xlu0 1
  %1330 = vperm.xlu0 %1329, %v116
  %v1331 = vpop.permute.xlu0 %1330
  %1333 = vset.pattern.permute.xlu0 1
  %1334 = vperm.xlu0 %1333, %v117
  %v1335 = vpop.permute.xlu0 %1334
  %1337 = vset.pattern.permute.xlu0 1
  %1338 = vperm.xlu0 %1337, %v118
  %v1339 = vpop.permute.xlu0 %1338
  %1341 = vset.pattern.permute.xlu0 1
  %1342 = vperm.xlu0 %1341, %v119
  %v1343 = vpop.permute.xlu0 %1342
  %1345 = vset.pattern.permute.xlu0 1
  %1346 = vperm.xlu0 %1345, %v120
  %v1347 = vpop.permute.xlu0 %1346
  %1349 = vset.pattern.permute.xlu0 1
  %1350 = vperm.xlu0 %1349, %v121
  %v1351 = vpop.permute.xlu0 %1350
  %1353 = vset.pattern.permute.xlu0 1
  %1354 = vperm.xlu0 %1353, %v122
  %v1355 = vpop.permute.xlu0 %1354
  %1357 = vset.pattern.permute.xlu0 1
  %1358 = vperm.xlu0 %1357, %v123
  %v1359 = vpop.permute.xlu0 %1358
  %1361 = vset.pattern.permute.xlu0 1
  %1362 = vperm.xlu0 %1361, %v124
  %v1363 = vpop.permute.xlu0 %1362
  %1365 = vset.pattern.permute.xlu0 1
  %1366 = vperm.xlu0 %1365, %v125
  %v1367 = vpop.permute.xlu0 %1366
  %1369 = vset.pattern.permute.xlu0 1
  %1370 = vperm.xlu0 %1369, %v126
  %v1371 = vpop.permute.xlu0 %1370
  %1373 = vset.pattern.permute.xlu0 1
  %1374 = vperm.xlu0 %1373, %v127
  %v1375 = vpop.permute.xlu0 %1374
  %1377 = vset.pattern.permute.xlu0 1
  %1378 = vperm.xlu0 %1377, %v128
  %v1379 = vpop.permute.xlu0 %1378
  %1381 = vset.pattern.permute.xlu0 1
  %1382 = vperm.xlu0 %1381, %v129
  %v1383 = vpop.permute.xlu0 %1382
  %1385 = vset.pattern.permute.xlu0 1
  %1386 = vperm.xlu0 %1385, %v130
  %v1387 = vpop.permute.xlu0 %1386
  %1389 = vset.pattern.permute.xlu0 1
  %1390 = vperm.xlu0 %1389, %v131
  %v1391 = vpop.permute.xlu0 %1390
  %1393 = vset.pattern.permute.xlu0 1
  %1394 = vperm.xlu0 %1393, %v132
  %v1395 = vpop.permute.xlu0 %1394
  %1397 = vset.pattern.permute.xlu0 1
  %1398 = vperm.xlu0 %1397, %v133
  %v1399 = vpop.permute.xlu0 %1398
  %1401 = vset.pattern.permute.xlu0 1
  %1402 = vperm.xlu0 %1401, %v134
  %v1403 = vpop.permute.xlu0 %1402
  %1405 = vset.pattern.permute.xlu0 1
  %1406 = vperm.xlu0 %1405, %v135
  %v1407 = vpop.permute.xlu0 %1406
  %1409 = vset.pattern.permute.xlu0 1
  %1410 = vperm.xlu0 %1409, %v136
  %v1411 = vpop.permute.xlu0 %1410
  %1413 = vset.pattern.permute.xlu0 1
  %1414 = vperm.xlu0 %1413, %v137
  %v1415 = vpop.permute.xlu0 %1414
  %1417 = vset.pattern.permute.xlu0 1
  %1418 = vperm.xlu0 %1417, %v138
  %v1419 = vpop.permute.xlu0 %1418
  %v1421 = vperm.slane %v139, 1
  %v1422 = vmul.f32 %v911, %v1421
  %v1423 = vmul.f32 %v915, %v1421
  %v1424 = vmul.f32 %v919, %v1421
  %v1425 = vmul.f32 %v923, %v1421
  %v1426 = vmul.f32 %v927, %v1421
  %v1427 = vmul.f32 %v931, %v1421
  %v1428 = vmul.f32 %v935, %v1421
  %v1429 = vmul.f32 %v939, %v1421
  %v1430 = vmul.f32 %v943, %v1421
  %v1431 = vmul.f32 %v947, %v1421
  %v1432 = vmul.f32 %v951, %v1421
  %v1433 = vmul.f32 %v955, %v1421
  %v1434 = vmul.f32 %v959, %v1421
  %v1435 = vmul.f32 %v963, %v1421
  %v1436 = vmul.f32 %v967, %v1421
  %v1437 = vmul.f32 %v971, %v1421
  %v1438 = vmul.f32 %v975, %v1421
  %v1439 = vmul.f32 %v979, %v1421
  %v1440 = vmul.f32 %v983, %v1421
  %v1441 = vmul.f32 %v987, %v1421
  %v1442 = vmul.f32 %v991, %v1421
  %v1443 = vmul.f32 %v995, %v1421
  %v1444 = vmul.f32 %v999, %v1421
  %v1445 = vmul.f32 %v1003, %v1421
  %v1446 = vmul.f32 %v1007, %v1421
  %v1447 = vmul.f32 %v1011, %v1421
  %v1448 = vmul.f32 %v1015, %v1421
  %v1449 = vmul.f32 %v1019, %v1421
  %v1450 = vmul.f32 %v1023, %v1421
  %v1451 = vmul.f32 %v1027, %v1421
  %v1452 = vmul.f32 %v1031, %v1421
  %v1453 = vmul.f32 %v1035, %v1421
  %v1454 = vmul.f32 %v1039, %v1421
  %v1455 = vmul.f32 %v1043, %v1421
  %v1456 = vmul.f32 %v1047, %v1421
  %v1457 = vmul.f32 %v1051, %v1421
  %v1458 = vmul.f32 %v1055, %v1421
  %v1459 = vmul.f32 %v1059, %v1421
  %v1460 = vmul.f32 %v1063, %v1421
  %v1461 = vmul.f32 %v1067, %v1421
  %v1462 = vmul.f32 %v1071, %v1421
  %v1463 = vmul.f32 %v1075, %v1421
  %v1464 = vmul.f32 %v1079, %v1421
  %v1465 = vmul.f32 %v1083, %v1421
  %v1466 = vmul.f32 %v1087, %v1421
  %v1467 = vmul.f32 %v1091, %v1421
  %v1468 = vmul.f32 %v1095, %v1421
  %v1469 = vmul.f32 %v1099, %v1421
  %v1470 = vmul.f32 %v1103, %v1421
  %v1471 = vmul.f32 %v1107, %v1421
  %v1472 = vmul.f32 %v1111, %v1421
  %v1473 = vmul.f32 %v1115, %v1421
  %v1474 = vmul.f32 %v1119, %v1421
  %v1475 = vmul.f32 %v1123, %v1421
  %v1476 = vmul.f32 %v1127, %v1421
  %v1477 = vmul.f32 %v1131, %v1421
  %v1478 = vmul.f32 %v1135, %v1421
  %v1479 = vmul.f32 %v1139, %v1421
  %v1480 = vmul.f32 %v1143, %v1421
  %v1481 = vmul.f32 %v1147, %v1421
  %v1482 = vmul.f32 %v1151, %v1421
  %v1483 = vmul.f32 %v1155, %v1421
  %v1484 = vmul.f32 %v1159, %v1421
  %v1485 = vmul.f32 %v1163, %v1421
  %v1486 = vmul.f32 %v1167, %v1421
  %v1487 = vmul.f32 %v1171, %v1421
  %v1488 = vmul.f32 %v1175, %v1421
  %v1489 = vmul.f32 %v1179, %v1421
  %v1490 = vmul.f32 %v1183, %v1421
  %v1491 = vmul.f32 %v1187, %v1421
  %v1492 = vmul.f32 %v1191, %v1421
  %v1493 = vmul.f32 %v1195, %v1421
  %v1494 = vmul.f32 %v1199, %v1421
  %v1495 = vmul.f32 %v1203, %v1421
  %v1496 = vmul.f32 %v1207, %v1421
  %v1497 = vmul.f32 %v1211, %v1421
  %v1498 = vmul.f32 %v1215, %v1421
  %v1499 = vmul.f32 %v1219, %v1421
  %v1500 = vmul.f32 %v1223, %v1421
  %v1501 = vmul.f32 %v1227, %v1421
  %v1502 = vmul.f32 %v1231, %v1421
  %v1503 = vmul.f32 %v1235, %v1421
  %v1504 = vmul.f32 %v1239, %v1421
  %v1505 = vmul.f32 %v1243, %v1421
  %v1506 = vmul.f32 %v1247, %v1421
  %v1507 = vmul.f32 %v1251, %v1421
  %v1508 = vmul.f32 %v1255, %v1421
  %v1509 = vmul.f32 %v1259, %v1421
  %v1510 = vmul.f32 %v1263, %v1421
  %v1511 = vmul.f32 %v1267, %v1421
  %v1512 = vmul.f32 %v1271, %v1421
  %v1513 = vmul.f32 %v1275, %v1421
  %v1514 = vmul.f32 %v1279, %v1421
  %v1515 = vmul.f32 %v1283, %v1421
  %v1516 = vmul.f32 %v1287, %v1421
  %v1517 = vmul.f32 %v1291, %v1421
  %v1518 = vmul.f32 %v1295, %v1421
  %v1519 = vmul.f32 %v1299, %v1421
  %v1520 = vmul.f32 %v1303, %v1421
  %v1521 = vmul.f32 %v1307, %v1421
  %v1522 = vmul.f32 %v1311, %v1421
  %v1523 = vmul.f32 %v1315, %v1421
  %v1524 = vmul.f32 %v1319, %v1421
  %v1525 = vmul.f32 %v1323, %v1421
  %v1526 = vmul.f32 %v1327, %v1421
  %v1527 = vmul.f32 %v1331, %v1421
  %v1528 = vmul.f32 %v1335, %v1421
  %v1529 = vmul.f32 %v1339, %v1421
  %v1530 = vmul.f32 %v1343, %v1421
  %v1531 = vmul.f32 %v1347, %v1421
  %v1532 = vmul.f32 %v1351, %v1421
  %v1533 = vmul.f32 %v1355, %v1421
  %v1534 = vmul.f32 %v1359, %v1421
  %v1535 = vmul.f32 %v1363, %v1421
  %v1536 = vmul.f32 %v1367, %v1421
  %v1537 = vmul.f32 %v1371, %v1421
  %v1538 = vmul.f32 %v1375, %v1421
  %v1539 = vmul.f32 %v1379, %v1421
  %v1540 = vmul.f32 %v1383, %v1421
  %v1541 = vmul.f32 %v1387, %v1421
  %v1542 = vmul.f32 %v1391, %v1421
  %v1543 = vmul.f32 %v1395, %v1421
  %v1544 = vmul.f32 %v1399, %v1421
  %v1545 = vmul.f32 %v1403, %v1421
  %v1546 = vmul.f32 %v1407, %v1421
  %v1547 = vmul.f32 %v1411, %v1421
  %v1548 = vmul.f32 %v1415, %v1421
  %v1549 = vmul.f32 %v1419, %v1421
  %v1550 = vadd.f32 %v781, %v1422
  %v1551 = vadd.f32 %v782, %v1423
  %v1552 = vadd.f32 %v783, %v1424
  %v1553 = vadd.f32 %v784, %v1425
  %v1554 = vadd.f32 %v785, %v1426
  %v1555 = vadd.f32 %v786, %v1427
  %v1556 = vadd.f32 %v787, %v1428
  %v1557 = vadd.f32 %v788, %v1429
  %v1558 = vadd.f32 %v789, %v1430
  %v1559 = vadd.f32 %v790, %v1431
  %v1560 = vadd.f32 %v791, %v1432
  %v1561 = vadd.f32 %v792, %v1433
  %v1562 = vadd.f32 %v793, %v1434
  %v1563 = vadd.f32 %v794, %v1435
  %v1564 = vadd.f32 %v795, %v1436
  %v1565 = vadd.f32 %v796, %v1437
  %v1566 = vadd.f32 %v797, %v1438
  %v1567 = vadd.f32 %v798, %v1439
  %v1568 = vadd.f32 %v799, %v1440
  %v1569 = vadd.f32 %v800, %v1441
  %v1570 = vadd.f32 %v801, %v1442
  %v1571 = vadd.f32 %v802, %v1443
  %v1572 = vadd.f32 %v803, %v1444
  %v1573 = vadd.f32 %v804, %v1445
  %v1574 = vadd.f32 %v805, %v1446
  %v1575 = vadd.f32 %v806, %v1447
  %v1576 = vadd.f32 %v807, %v1448
  %v1577 = vadd.f32 %v808, %v1449
  %v1578 = vadd.f32 %v809, %v1450
  %v1579 = vadd.f32 %v810, %v1451
  %v1580 = vadd.f32 %v811, %v1452
  %v1581 = vadd.f32 %v812, %v1453
  %v1582 = vadd.f32 %v813, %v1454
  %v1583 = vadd.f32 %v814, %v1455
  %v1584 = vadd.f32 %v815, %v1456
  %v1585 = vadd.f32 %v816, %v1457
  %v1586 = vadd.f32 %v817, %v1458
  %v1587 = vadd.f32 %v818, %v1459
  %v1588 = vadd.f32 %v819, %v1460
  %v1589 = vadd.f32 %v820, %v1461
  %v1590 = vadd.f32 %v821, %v1462
  %v1591 = vadd.f32 %v822, %v1463
  %v1592 = vadd.f32 %v823, %v1464
  %v1593 = vadd.f32 %v824, %v1465
  %v1594 = vadd.f32 %v825, %v1466
  %v1595 = vadd.f32 %v826, %v1467
  %v1596 = vadd.f32 %v827, %v1468
  %v1597 = vadd.f32 %v828, %v1469
  %v1598 = vadd.f32 %v829, %v1470
  %v1599 = vadd.f32 %v830, %v1471
  %v1600 = vadd.f32 %v831, %v1472
  %v1601 = vadd.f32 %v832, %v1473
  %v1602 = vadd.f32 %v833, %v1474
  %v1603 = vadd.f32 %v834, %v1475
  %v1604 = vadd.f32 %v835, %v1476
  %v1605 = vadd.f32 %v836, %v1477
  %v1606 = vadd.f32 %v837, %v1478
  %v1607 = vadd.f32 %v838, %v1479
  %v1608 = vadd.f32 %v839, %v1480
  %v1609 = vadd.f32 %v840, %v1481
  %v1610 = vadd.f32 %v841, %v1482
  %v1611 = vadd.f32 %v842, %v1483
  %v1612 = vadd.f32 %v843, %v1484
  %v1613 = vadd.f32 %v844, %v1485
  %v1614 = vadd.f32 %v845, %v1486
  %v1615 = vadd.f32 %v846, %v1487
  %v1616 = vadd.f32 %v847, %v1488
  %v1617 = vadd.f32 %v848, %v1489
  %v1618 = vadd.f32 %v849, %v1490
  %v1619 = vadd.f32 %v850, %v1491
  %v1620 = vadd.f32 %v851, %v1492
  %v1621 = vadd.f32 %v852, %v1493
  %v1622 = vadd.f32 %v853, %v1494
  %v1623 = vadd.f32 %v854, %v1495
  %v1624 = vadd.f32 %v855, %v1496
  %v1625 = vadd.f32 %v856, %v1497
  %v1626 = vadd.f32 %v857, %v1498
  %v1627 = vadd.f32 %v858, %v1499
  %v1628 = vadd.f32 %v859, %v1500
  %v1629 = vadd.f32 %v860, %v1501
  %v1630 = vadd.f32 %v861, %v1502
  %v1631 = vadd.f32 %v862, %v1503
  %v1632 = vadd.f32 %v863, %v1504
  %v1633 = vadd.f32 %v864, %v1505
  %v1634 = vadd.f32 %v865, %v1506
  %v1635 = vadd.f32 %v866, %v1507
  %v1636 = vadd.f32 %v867, %v1508
  %v1637 = vadd.f32 %v868, %v1509
  %v1638 = vadd.f32 %v869, %v1510
  %v1639 = vadd.f32 %v870, %v1511
  %v1640 = vadd.f32 %v871, %v1512
  %v1641 = vadd.f32 %v872, %v1513
  %v1642 = vadd.f32 %v873, %v1514
  %v1643 = vadd.f32 %v874, %v1515
  %v1644 = vadd.f32 %v875, %v1516
  %v1645 = vadd.f32 %v876, %v1517
  %v1646 = vadd.f32 %v877, %v1518
  %v1647 = vadd.f32 %v878, %v1519
  %v1648 = vadd.f32 %v879, %v1520
  %v1649 = vadd.f32 %v880, %v1521
  %v1650 = vadd.f32 %v881, %v1522
  %v1651 = vadd.f32 %v882, %v1523
  %v1652 = vadd.f32 %v883, %v1524
  %v1653 = vadd.f32 %v884, %v1525
  %v1654 = vadd.f32 %v885, %v1526
  %v1655 = vadd.f32 %v886, %v1527
  %v1656 = vadd.f32 %v887, %v1528
  %v1657 = vadd.f32 %v888, %v1529
  %v1658 = vadd.f32 %v889, %v1530
  %v1659 = vadd.f32 %v890, %v1531
  %v1660 = vadd.f32 %v891, %v1532
  %v1661 = vadd.f32 %v892, %v1533
  %v1662 = vadd.f32 %v893, %v1534
  %v1663 = vadd.f32 %v894, %v1535
  %v1664 = vadd.f32 %v895, %v1536
  %v1665 = vadd.f32 %v896, %v1537
  %v1666 = vadd.f32 %v897, %v1538
  %v1667 = vadd.f32 %v898, %v1539
  %v1668 = vadd.f32 %v899, %v1540
  %v1669 = vadd.f32 %v900, %v1541
  %v1670 = vadd.f32 %v901, %v1542
  %v1671 = vadd.f32 %v902, %v1543
  %v1672 = vadd.f32 %v903, %v1544
  %v1673 = vadd.f32 %v904, %v1545
  %v1674 = vadd.f32 %v905, %v1546
  %v1675 = vadd.f32 %v906, %v1547
  %v1676 = vadd.f32 %v907, %v1548
  %v1677 = vadd.f32 %v908, %v1549
  %1678 = vset.pattern.permute.xlu0 2
  %1679 = vperm.xlu0 %1678, %v11
  %v1680 = vpop.permute.xlu0 %1679
  %1682 = vset.pattern.permute.xlu0 2
  %1683 = vperm.xlu0 %1682, %v12
  %v1684 = vpop.permute.xlu0 %1683
  %1686 = vset.pattern.permute.xlu0 2
  %1687 = vperm.xlu0 %1686, %v13
  %v1688 = vpop.permute.xlu0 %1687
  %1690 = vset.pattern.permute.xlu0 2
  %1691 = vperm.xlu0 %1690, %v14
  %v1692 = vpop.permute.xlu0 %1691
  %1694 = vset.pattern.permute.xlu0 2
  %1695 = vperm.xlu0 %1694, %v15
  %v1696 = vpop.permute.xlu0 %1695
  %1698 = vset.pattern.permute.xlu0 2
  %1699 = vperm.xlu0 %1698, %v16
  %v1700 = vpop.permute.xlu0 %1699
  %1702 = vset.pattern.permute.xlu0 2
  %1703 = vperm.xlu0 %1702, %v17
  %v1704 = vpop.permute.xlu0 %1703
  %1706 = vset.pattern.permute.xlu0 2
  %1707 = vperm.xlu0 %1706, %v18
  %v1708 = vpop.permute.xlu0 %1707
  %1710 = vset.pattern.permute.xlu0 2
  %1711 = vperm.xlu0 %1710, %v19
  %v1712 = vpop.permute.xlu0 %1711
  %1714 = vset.pattern.permute.xlu0 2
  %1715 = vperm.xlu0 %1714, %v20
  %v1716 = vpop.permute.xlu0 %1715
  %1718 = vset.pattern.permute.xlu0 2
  %1719 = vperm.xlu0 %1718, %v21
  %v1720 = vpop.permute.xlu0 %1719
  %1722 = vset.pattern.permute.xlu0 2
  %1723 = vperm.xlu0 %1722, %v22
  %v1724 = vpop.permute.xlu0 %1723
  %1726 = vset.pattern.permute.xlu0 2
  %1727 = vperm.xlu0 %1726, %v23
  %v1728 = vpop.permute.xlu0 %1727
  %1730 = vset.pattern.permute.xlu0 2
  %1731 = vperm.xlu0 %1730, %v24
  %v1732 = vpop.permute.xlu0 %1731
  %1734 = vset.pattern.permute.xlu0 2
  %1735 = vperm.xlu0 %1734, %v25
  %v1736 = vpop.permute.xlu0 %1735
  %1738 = vset.pattern.permute.xlu0 2
  %1739 = vperm.xlu0 %1738, %v26
  %v1740 = vpop.permute.xlu0 %1739
  %1742 = vset.pattern.permute.xlu0 2
  %1743 = vperm.xlu0 %1742, %v27
  %v1744 = vpop.permute.xlu0 %1743
  %1746 = vset.pattern.permute.xlu0 2
  %1747 = vperm.xlu0 %1746, %v28
  %v1748 = vpop.permute.xlu0 %1747
  %1750 = vset.pattern.permute.xlu0 2
  %1751 = vperm.xlu0 %1750, %v29
  %v1752 = vpop.permute.xlu0 %1751
  %1754 = vset.pattern.permute.xlu0 2
  %1755 = vperm.xlu0 %1754, %v30
  %v1756 = vpop.permute.xlu0 %1755
  %1758 = vset.pattern.permute.xlu0 2
  %1759 = vperm.xlu0 %1758, %v31
  %v1760 = vpop.permute.xlu0 %1759
  %1762 = vset.pattern.permute.xlu0 2
  %1763 = vperm.xlu0 %1762, %v32
  %v1764 = vpop.permute.xlu0 %1763
  %1766 = vset.pattern.permute.xlu0 2
  %1767 = vperm.xlu0 %1766, %v33
  %v1768 = vpop.permute.xlu0 %1767
  %1770 = vset.pattern.permute.xlu0 2
  %1771 = vperm.xlu0 %1770, %v34
  %v1772 = vpop.permute.xlu0 %1771
  %1774 = vset.pattern.permute.xlu0 2
  %1775 = vperm.xlu0 %1774, %v35
  %v1776 = vpop.permute.xlu0 %1775
  %1778 = vset.pattern.permute.xlu0 2
  %1779 = vperm.xlu0 %1778, %v36
  %v1780 = vpop.permute.xlu0 %1779
  %1782 = vset.pattern.permute.xlu0 2
  %1783 = vperm.xlu0 %1782, %v37
  %v1784 = vpop.permute.xlu0 %1783
  %1786 = vset.pattern.permute.xlu0 2
  %1787 = vperm.xlu0 %1786, %v38
  %v1788 = vpop.permute.xlu0 %1787
  %1790 = vset.pattern.permute.xlu0 2
  %1791 = vperm.xlu0 %1790, %v39
  %v1792 = vpop.permute.xlu0 %1791
  %1794 = vset.pattern.permute.xlu0 2
  %1795 = vperm.xlu0 %1794, %v40
  %v1796 = vpop.permute.xlu0 %1795
  %1798 = vset.pattern.permute.xlu0 2
  %1799 = vperm.xlu0 %1798, %v41
  %v1800 = vpop.permute.xlu0 %1799
  %1802 = vset.pattern.permute.xlu0 2
  %1803 = vperm.xlu0 %1802, %v42
  %v1804 = vpop.permute.xlu0 %1803
  %1806 = vset.pattern.permute.xlu0 2
  %1807 = vperm.xlu0 %1806, %v43
  %v1808 = vpop.permute.xlu0 %1807
  %1810 = vset.pattern.permute.xlu0 2
  %1811 = vperm.xlu0 %1810, %v44
  %v1812 = vpop.permute.xlu0 %1811
  %1814 = vset.pattern.permute.xlu0 2
  %1815 = vperm.xlu0 %1814, %v45
  %v1816 = vpop.permute.xlu0 %1815
  %1818 = vset.pattern.permute.xlu0 2
  %1819 = vperm.xlu0 %1818, %v46
  %v1820 = vpop.permute.xlu0 %1819
  %1822 = vset.pattern.permute.xlu0 2
  %1823 = vperm.xlu0 %1822, %v47
  %v1824 = vpop.permute.xlu0 %1823
  %1826 = vset.pattern.permute.xlu0 2
  %1827 = vperm.xlu0 %1826, %v48
  %v1828 = vpop.permute.xlu0 %1827
  %1830 = vset.pattern.permute.xlu0 2
  %1831 = vperm.xlu0 %1830, %v49
  %v1832 = vpop.permute.xlu0 %1831
  %1834 = vset.pattern.permute.xlu0 2
  %1835 = vperm.xlu0 %1834, %v50
  %v1836 = vpop.permute.xlu0 %1835
  %1838 = vset.pattern.permute.xlu0 2
  %1839 = vperm.xlu0 %1838, %v51
  %v1840 = vpop.permute.xlu0 %1839
  %1842 = vset.pattern.permute.xlu0 2
  %1843 = vperm.xlu0 %1842, %v52
  %v1844 = vpop.permute.xlu0 %1843
  %1846 = vset.pattern.permute.xlu0 2
  %1847 = vperm.xlu0 %1846, %v53
  %v1848 = vpop.permute.xlu0 %1847
  %1850 = vset.pattern.permute.xlu0 2
  %1851 = vperm.xlu0 %1850, %v54
  %v1852 = vpop.permute.xlu0 %1851
  %1854 = vset.pattern.permute.xlu0 2
  %1855 = vperm.xlu0 %1854, %v55
  %v1856 = vpop.permute.xlu0 %1855
  %1858 = vset.pattern.permute.xlu0 2
  %1859 = vperm.xlu0 %1858, %v56
  %v1860 = vpop.permute.xlu0 %1859
  %1862 = vset.pattern.permute.xlu0 2
  %1863 = vperm.xlu0 %1862, %v57
  %v1864 = vpop.permute.xlu0 %1863
  %1866 = vset.pattern.permute.xlu0 2
  %1867 = vperm.xlu0 %1866, %v58
  %v1868 = vpop.permute.xlu0 %1867
  %1870 = vset.pattern.permute.xlu0 2
  %1871 = vperm.xlu0 %1870, %v59
  %v1872 = vpop.permute.xlu0 %1871
  %1874 = vset.pattern.permute.xlu0 2
  %1875 = vperm.xlu0 %1874, %v60
  %v1876 = vpop.permute.xlu0 %1875
  %1878 = vset.pattern.permute.xlu0 2
  %1879 = vperm.xlu0 %1878, %v61
  %v1880 = vpop.permute.xlu0 %1879
  %1882 = vset.pattern.permute.xlu0 2
  %1883 = vperm.xlu0 %1882, %v62
  %v1884 = vpop.permute.xlu0 %1883
  %1886 = vset.pattern.permute.xlu0 2
  %1887 = vperm.xlu0 %1886, %v63
  %v1888 = vpop.permute.xlu0 %1887
  %1890 = vset.pattern.permute.xlu0 2
  %1891 = vperm.xlu0 %1890, %v64
  %v1892 = vpop.permute.xlu0 %1891
  %1894 = vset.pattern.permute.xlu0 2
  %1895 = vperm.xlu0 %1894, %v65
  %v1896 = vpop.permute.xlu0 %1895
  %1898 = vset.pattern.permute.xlu0 2
  %1899 = vperm.xlu0 %1898, %v66
  %v1900 = vpop.permute.xlu0 %1899
  %1902 = vset.pattern.permute.xlu0 2
  %1903 = vperm.xlu0 %1902, %v67
  %v1904 = vpop.permute.xlu0 %1903
  %1906 = vset.pattern.permute.xlu0 2
  %1907 = vperm.xlu0 %1906, %v68
  %v1908 = vpop.permute.xlu0 %1907
  %1910 = vset.pattern.permute.xlu0 2
  %1911 = vperm.xlu0 %1910, %v69
  %v1912 = vpop.permute.xlu0 %1911
  %1914 = vset.pattern.permute.xlu0 2
  %1915 = vperm.xlu0 %1914, %v70
  %v1916 = vpop.permute.xlu0 %1915
  %1918 = vset.pattern.permute.xlu0 2
  %1919 = vperm.xlu0 %1918, %v71
  %v1920 = vpop.permute.xlu0 %1919
  %1922 = vset.pattern.permute.xlu0 2
  %1923 = vperm.xlu0 %1922, %v72
  %v1924 = vpop.permute.xlu0 %1923
  %1926 = vset.pattern.permute.xlu0 2
  %1927 = vperm.xlu0 %1926, %v73
  %v1928 = vpop.permute.xlu0 %1927
  %1930 = vset.pattern.permute.xlu0 2
  %1931 = vperm.xlu0 %1930, %v74
  %v1932 = vpop.permute.xlu0 %1931
  %1934 = vset.pattern.permute.xlu0 2
  %1935 = vperm.xlu0 %1934, %v75
  %v1936 = vpop.permute.xlu0 %1935
  %1938 = vset.pattern.permute.xlu0 2
  %1939 = vperm.xlu0 %1938, %v76
  %v1940 = vpop.permute.xlu0 %1939
  %1942 = vset.pattern.permute.xlu0 2
  %1943 = vperm.xlu0 %1942, %v77
  %v1944 = vpop.permute.xlu0 %1943
  %1946 = vset.pattern.permute.xlu0 2
  %1947 = vperm.xlu0 %1946, %v78
  %v1948 = vpop.permute.xlu0 %1947
  %1950 = vset.pattern.permute.xlu0 2
  %1951 = vperm.xlu0 %1950, %v79
  %v1952 = vpop.permute.xlu0 %1951
  %1954 = vset.pattern.permute.xlu0 2
  %1955 = vperm.xlu0 %1954, %v80
  %v1956 = vpop.permute.xlu0 %1955
  %1958 = vset.pattern.permute.xlu0 2
  %1959 = vperm.xlu0 %1958, %v81
  %v1960 = vpop.permute.xlu0 %1959
  %1962 = vset.pattern.permute.xlu0 2
  %1963 = vperm.xlu0 %1962, %v82
  %v1964 = vpop.permute.xlu0 %1963
  %1966 = vset.pattern.permute.xlu0 2
  %1967 = vperm.xlu0 %1966, %v83
  %v1968 = vpop.permute.xlu0 %1967
  %1970 = vset.pattern.permute.xlu0 2
  %1971 = vperm.xlu0 %1970, %v84
  %v1972 = vpop.permute.xlu0 %1971
  %1974 = vset.pattern.permute.xlu0 2
  %1975 = vperm.xlu0 %1974, %v85
  %v1976 = vpop.permute.xlu0 %1975
  %1978 = vset.pattern.permute.xlu0 2
  %1979 = vperm.xlu0 %1978, %v86
  %v1980 = vpop.permute.xlu0 %1979
  %1982 = vset.pattern.permute.xlu0 2
  %1983 = vperm.xlu0 %1982, %v87
  %v1984 = vpop.permute.xlu0 %1983
  %1986 = vset.pattern.permute.xlu0 2
  %1987 = vperm.xlu0 %1986, %v88
  %v1988 = vpop.permute.xlu0 %1987
  %1990 = vset.pattern.permute.xlu0 2
  %1991 = vperm.xlu0 %1990, %v89
  %v1992 = vpop.permute.xlu0 %1991
  %1994 = vset.pattern.permute.xlu0 2
  %1995 = vperm.xlu0 %1994, %v90
  %v1996 = vpop.permute.xlu0 %1995
  %1998 = vset.pattern.permute.xlu0 2
  %1999 = vperm.xlu0 %1998, %v91
  %v2000 = vpop.permute.xlu0 %1999
  %2002 = vset.pattern.permute.xlu0 2
  %2003 = vperm.xlu0 %2002, %v92
  %v2004 = vpop.permute.xlu0 %2003
  %2006 = vset.pattern.permute.xlu0 2
  %2007 = vperm.xlu0 %2006, %v93
  %v2008 = vpop.permute.xlu0 %2007
  %2010 = vset.pattern.permute.xlu0 2
  %2011 = vperm.xlu0 %2010, %v94
  %v2012 = vpop.permute.xlu0 %2011
  %2014 = vset.pattern.permute.xlu0 2
  %2015 = vperm.xlu0 %2014, %v95
  %v2016 = vpop.permute.xlu0 %2015
  %2018 = vset.pattern.permute.xlu0 2
  %2019 = vperm.xlu0 %2018, %v96
  %v2020 = vpop.permute.xlu0 %2019
  %2022 = vset.pattern.permute.xlu0 2
  %2023 = vperm.xlu0 %2022, %v97
  %v2024 = vpop.permute.xlu0 %2023
  %2026 = vset.pattern.permute.xlu0 2
  %2027 = vperm.xlu0 %2026, %v98
  %v2028 = vpop.permute.xlu0 %2027
  %2030 = vset.pattern.permute.xlu0 2
  %2031 = vperm.xlu0 %2030, %v99
  %v2032 = vpop.permute.xlu0 %2031
  %2034 = vset.pattern.permute.xlu0 2
  %2035 = vperm.xlu0 %2034, %v100
  %v2036 = vpop.permute.xlu0 %2035
  %2038 = vset.pattern.permute.xlu0 2
  %2039 = vperm.xlu0 %2038, %v101
  %v2040 = vpop.permute.xlu0 %2039
  %2042 = vset.pattern.permute.xlu0 2
  %2043 = vperm.xlu0 %2042, %v102
  %v2044 = vpop.permute.xlu0 %2043
  %2046 = vset.pattern.permute.xlu0 2
  %2047 = vperm.xlu0 %2046, %v103
  %v2048 = vpop.permute.xlu0 %2047
  %2050 = vset.pattern.permute.xlu0 2
  %2051 = vperm.xlu0 %2050, %v104
  %v2052 = vpop.permute.xlu0 %2051
  %2054 = vset.pattern.permute.xlu0 2
  %2055 = vperm.xlu0 %2054, %v105
  %v2056 = vpop.permute.xlu0 %2055
  %2058 = vset.pattern.permute.xlu0 2
  %2059 = vperm.xlu0 %2058, %v106
  %v2060 = vpop.permute.xlu0 %2059
  %2062 = vset.pattern.permute.xlu0 2
  %2063 = vperm.xlu0 %2062, %v107
  %v2064 = vpop.permute.xlu0 %2063
  %2066 = vset.pattern.permute.xlu0 2
  %2067 = vperm.xlu0 %2066, %v108
  %v2068 = vpop.permute.xlu0 %2067
  %2070 = vset.pattern.permute.xlu0 2
  %2071 = vperm.xlu0 %2070, %v109
  %v2072 = vpop.permute.xlu0 %2071
  %2074 = vset.pattern.permute.xlu0 2
  %2075 = vperm.xlu0 %2074, %v110
  %v2076 = vpop.permute.xlu0 %2075
  %2078 = vset.pattern.permute.xlu0 2
  %2079 = vperm.xlu0 %2078, %v111
  %v2080 = vpop.permute.xlu0 %2079
  %2082 = vset.pattern.permute.xlu0 2
  %2083 = vperm.xlu0 %2082, %v112
  %v2084 = vpop.permute.xlu0 %2083
  %2086 = vset.pattern.permute.xlu0 2
  %2087 = vperm.xlu0 %2086, %v113
  %v2088 = vpop.permute.xlu0 %2087
  %2090 = vset.pattern.permute.xlu0 2
  %2091 = vperm.xlu0 %2090, %v114
  %v2092 = vpop.permute.xlu0 %2091
  %2094 = vset.pattern.permute.xlu0 2
  %2095 = vperm.xlu0 %2094, %v115
  %v2096 = vpop.permute.xlu0 %2095
  %2098 = vset.pattern.permute.xlu0 2
  %2099 = vperm.xlu0 %2098, %v116
  %v2100 = vpop.permute.xlu0 %2099
  %2102 = vset.pattern.permute.xlu0 2
  %2103 = vperm.xlu0 %2102, %v117
  %v2104 = vpop.permute.xlu0 %2103
  %2106 = vset.pattern.permute.xlu0 2
  %2107 = vperm.xlu0 %2106, %v118
  %v2108 = vpop.permute.xlu0 %2107
  %2110 = vset.pattern.permute.xlu0 2
  %2111 = vperm.xlu0 %2110, %v119
  %v2112 = vpop.permute.xlu0 %2111
  %2114 = vset.pattern.permute.xlu0 2
  %2115 = vperm.xlu0 %2114, %v120
  %v2116 = vpop.permute.xlu0 %2115
  %2118 = vset.pattern.permute.xlu0 2
  %2119 = vperm.xlu0 %2118, %v121
  %v2120 = vpop.permute.xlu0 %2119
  %2122 = vset.pattern.permute.xlu0 2
  %2123 = vperm.xlu0 %2122, %v122
  %v2124 = vpop.permute.xlu0 %2123
  %2126 = vset.pattern.permute.xlu0 2
  %2127 = vperm.xlu0 %2126, %v123
  %v2128 = vpop.permute.xlu0 %2127
  %2130 = vset.pattern.permute.xlu0 2
  %2131 = vperm.xlu0 %2130, %v124
  %v2132 = vpop.permute.xlu0 %2131
  %2134 = vset.pattern.permute.xlu0 2
  %2135 = vperm.xlu0 %2134, %v125
  %v2136 = vpop.permute.xlu0 %2135
  %2138 = vset.pattern.permute.xlu0 2
  %2139 = vperm.xlu0 %2138, %v126
  %v2140 = vpop.permute.xlu0 %2139
  %2142 = vset.pattern.permute.xlu0 2
  %2143 = vperm.xlu0 %2142, %v127
  %v2144 = vpop.permute.xlu0 %2143
  %2146 = vset.pattern.permute.xlu0 2
  %2147 = vperm.xlu0 %2146, %v128
  %v2148 = vpop.permute.xlu0 %2147
  %2150 = vset.pattern.permute.xlu0 2
  %2151 = vperm.xlu0 %2150, %v129
  %v2152 = vpop.permute.xlu0 %2151
  %2154 = vset.pattern.permute.xlu0 2
  %2155 = vperm.xlu0 %2154, %v130
  %v2156 = vpop.permute.xlu0 %2155
  %2158 = vset.pattern.permute.xlu0 2
  %2159 = vperm.xlu0 %2158, %v131
  %v2160 = vpop.permute.xlu0 %2159
  %2162 = vset.pattern.permute.xlu0 2
  %2163 = vperm.xlu0 %2162, %v132
  %v2164 = vpop.permute.xlu0 %2163
  %2166 = vset.pattern.permute.xlu0 2
  %2167 = vperm.xlu0 %2166, %v133
  %v2168 = vpop.permute.xlu0 %2167
  %2170 = vset.pattern.permute.xlu0 2
  %2171 = vperm.xlu0 %2170, %v134
  %v2172 = vpop.permute.xlu0 %2171
  %2174 = vset.pattern.permute.xlu0 2
  %2175 = vperm.xlu0 %2174, %v135
  %v2176 = vpop.permute.xlu0 %2175
  %2178 = vset.pattern.permute.xlu0 2
  %2179 = vperm.xlu0 %2178, %v136
  %v2180 = vpop.permute.xlu0 %2179
  %2182 = vset.pattern.permute.xlu0 2
  %2183 = vperm.xlu0 %2182, %v137
  %v2184 = vpop.permute.xlu0 %2183
  %2186 = vset.pattern.permute.xlu0 2
  %2187 = vperm.xlu0 %2186, %v138
  %v2188 = vpop.permute.xlu0 %2187
  %v2190 = vperm.slane %v139, 2
  %v2191 = vmul.f32 %v1680, %v2190
  %v2192 = vmul.f32 %v1684, %v2190
  %v2193 = vmul.f32 %v1688, %v2190
  %v2194 = vmul.f32 %v1692, %v2190
  %v2195 = vmul.f32 %v1696, %v2190
  %v2196 = vmul.f32 %v1700, %v2190
  %v2197 = vmul.f32 %v1704, %v2190
  %v2198 = vmul.f32 %v1708, %v2190
  %v2199 = vmul.f32 %v1712, %v2190
  %v2200 = vmul.f32 %v1716, %v2190
  %v2201 = vmul.f32 %v1720, %v2190
  %v2202 = vmul.f32 %v1724, %v2190
  %v2203 = vmul.f32 %v1728, %v2190
  %v2204 = vmul.f32 %v1732, %v2190
  %v2205 = vmul.f32 %v1736, %v2190
  %v2206 = vmul.f32 %v1740, %v2190
  %v2207 = vmul.f32 %v1744, %v2190
  %v2208 = vmul.f32 %v1748, %v2190
  %v2209 = vmul.f32 %v1752, %v2190
  %v2210 = vmul.f32 %v1756, %v2190
  %v2211 = vmul.f32 %v1760, %v2190
  %v2212 = vmul.f32 %v1764, %v2190
  %v2213 = vmul.f32 %v1768, %v2190
  %v2214 = vmul.f32 %v1772, %v2190
  %v2215 = vmul.f32 %v1776, %v2190
  %v2216 = vmul.f32 %v1780, %v2190
  %v2217 = vmul.f32 %v1784, %v2190
  %v2218 = vmul.f32 %v1788, %v2190
  %v2219 = vmul.f32 %v1792, %v2190
  %v2220 = vmul.f32 %v1796, %v2190
  %v2221 = vmul.f32 %v1800, %v2190
  %v2222 = vmul.f32 %v1804, %v2190
  %v2223 = vmul.f32 %v1808, %v2190
  %v2224 = vmul.f32 %v1812, %v2190
  %v2225 = vmul.f32 %v1816, %v2190
  %v2226 = vmul.f32 %v1820, %v2190
  %v2227 = vmul.f32 %v1824, %v2190
  %v2228 = vmul.f32 %v1828, %v2190
  %v2229 = vmul.f32 %v1832, %v2190
  %v2230 = vmul.f32 %v1836, %v2190
  %v2231 = vmul.f32 %v1840, %v2190
  %v2232 = vmul.f32 %v1844, %v2190
  %v2233 = vmul.f32 %v1848, %v2190
  %v2234 = vmul.f32 %v1852, %v2190
  %v2235 = vmul.f32 %v1856, %v2190
  %v2236 = vmul.f32 %v1860, %v2190
  %v2237 = vmul.f32 %v1864, %v2190
  %v2238 = vmul.f32 %v1868, %v2190
  %v2239 = vmul.f32 %v1872, %v2190
  %v2240 = vmul.f32 %v1876, %v2190
  %v2241 = vmul.f32 %v1880, %v2190
  %v2242 = vmul.f32 %v1884, %v2190
  %v2243 = vmul.f32 %v1888, %v2190
  %v2244 = vmul.f32 %v1892, %v2190
  %v2245 = vmul.f32 %v1896, %v2190
  %v2246 = vmul.f32 %v1900, %v2190
  %v2247 = vmul.f32 %v1904, %v2190
  %v2248 = vmul.f32 %v1908, %v2190
  %v2249 = vmul.f32 %v1912, %v2190
  %v2250 = vmul.f32 %v1916, %v2190
  %v2251 = vmul.f32 %v1920, %v2190
  %v2252 = vmul.f32 %v1924, %v2190
  %v2253 = vmul.f32 %v1928, %v2190
  %v2254 = vmul.f32 %v1932, %v2190
  %v2255 = vmul.f32 %v1936, %v2190
  %v2256 = vmul.f32 %v1940, %v2190
  %v2257 = vmul.f32 %v1944, %v2190
  %v2258 = vmul.f32 %v1948, %v2190
  %v2259 = vmul.f32 %v1952, %v2190
  %v2260 = vmul.f32 %v1956, %v2190
  %v2261 = vmul.f32 %v1960, %v2190
  %v2262 = vmul.f32 %v1964, %v2190
  %v2263 = vmul.f32 %v1968, %v2190
  %v2264 = vmul.f32 %v1972, %v2190
  %v2265 = vmul.f32 %v1976, %v2190
  %v2266 = vmul.f32 %v1980, %v2190
  %v2267 = vmul.f32 %v1984, %v2190
  %v2268 = vmul.f32 %v1988, %v2190
  %v2269 = vmul.f32 %v1992, %v2190
  %v2270 = vmul.f32 %v1996, %v2190
  %v2271 = vmul.f32 %v2000, %v2190
  %v2272 = vmul.f32 %v2004, %v2190
  %v2273 = vmul.f32 %v2008, %v2190
  %v2274 = vmul.f32 %v2012, %v2190
  %v2275 = vmul.f32 %v2016, %v2190
  %v2276 = vmul.f32 %v2020, %v2190
  %v2277 = vmul.f32 %v2024, %v2190
  %v2278 = vmul.f32 %v2028, %v2190
  %v2279 = vmul.f32 %v2032, %v2190
  %v2280 = vmul.f32 %v2036, %v2190
  %v2281 = vmul.f32 %v2040, %v2190
  %v2282 = vmul.f32 %v2044, %v2190
  %v2283 = vmul.f32 %v2048, %v2190
  %v2284 = vmul.f32 %v2052, %v2190
  %v2285 = vmul.f32 %v2056, %v2190
  %v2286 = vmul.f32 %v2060, %v2190
  %v2287 = vmul.f32 %v2064, %v2190
  %v2288 = vmul.f32 %v2068, %v2190
  %v2289 = vmul.f32 %v2072, %v2190
  %v2290 = vmul.f32 %v2076, %v2190
  %v2291 = vmul.f32 %v2080, %v2190
  %v2292 = vmul.f32 %v2084, %v2190
  %v2293 = vmul.f32 %v2088, %v2190
  %v2294 = vmul.f32 %v2092, %v2190
  %v2295 = vmul.f32 %v2096, %v2190
  %v2296 = vmul.f32 %v2100, %v2190
  %v2297 = vmul.f32 %v2104, %v2190
  %v2298 = vmul.f32 %v2108, %v2190
  %v2299 = vmul.f32 %v2112, %v2190
  %v2300 = vmul.f32 %v2116, %v2190
  %v2301 = vmul.f32 %v2120, %v2190
  %v2302 = vmul.f32 %v2124, %v2190
  %v2303 = vmul.f32 %v2128, %v2190
  %v2304 = vmul.f32 %v2132, %v2190
  %v2305 = vmul.f32 %v2136, %v2190
  %v2306 = vmul.f32 %v2140, %v2190
  %v2307 = vmul.f32 %v2144, %v2190
  %v2308 = vmul.f32 %v2148, %v2190
  %v2309 = vmul.f32 %v2152, %v2190
  %v2310 = vmul.f32 %v2156, %v2190
  %v2311 = vmul.f32 %v2160, %v2190
  %v2312 = vmul.f32 %v2164, %v2190
  %v2313 = vmul.f32 %v2168, %v2190
  %v2314 = vmul.f32 %v2172, %v2190
  %v2315 = vmul.f32 %v2176, %v2190
  %v2316 = vmul.f32 %v2180, %v2190
  %v2317 = vmul.f32 %v2184, %v2190
  %v2318 = vmul.f32 %v2188, %v2190
  %v2319 = vadd.f32 %v1550, %v2191
  %v2320 = vadd.f32 %v1551, %v2192
  %v2321 = vadd.f32 %v1552, %v2193
  %v2322 = vadd.f32 %v1553, %v2194
  %v2323 = vadd.f32 %v1554, %v2195
  %v2324 = vadd.f32 %v1555, %v2196
  %v2325 = vadd.f32 %v1556, %v2197
  %v2326 = vadd.f32 %v1557, %v2198
  %v2327 = vadd.f32 %v1558, %v2199
  %v2328 = vadd.f32 %v1559, %v2200
  %v2329 = vadd.f32 %v1560, %v2201
  %v2330 = vadd.f32 %v1561, %v2202
  %v2331 = vadd.f32 %v1562, %v2203
  %v2332 = vadd.f32 %v1563, %v2204
  %v2333 = vadd.f32 %v1564, %v2205
  %v2334 = vadd.f32 %v1565, %v2206
  %v2335 = vadd.f32 %v1566, %v2207
  %v2336 = vadd.f32 %v1567, %v2208
  %v2337 = vadd.f32 %v1568, %v2209
  %v2338 = vadd.f32 %v1569, %v2210
  %v2339 = vadd.f32 %v1570, %v2211
  %v2340 = vadd.f32 %v1571, %v2212
  %v2341 = vadd.f32 %v1572, %v2213
  %v2342 = vadd.f32 %v1573, %v2214
  %v2343 = vadd.f32 %v1574, %v2215
  %v2344 = vadd.f32 %v1575, %v2216
  %v2345 = vadd.f32 %v1576, %v2217
  %v2346 = vadd.f32 %v1577, %v2218
  %v2347 = vadd.f32 %v1578, %v2219
  %v2348 = vadd.f32 %v1579, %v2220
  %v2349 = vadd.f32 %v1580, %v2221
  %v2350 = vadd.f32 %v1581, %v2222
  %v2351 = vadd.f32 %v1582, %v2223
  %v2352 = vadd.f32 %v1583, %v2224
  %v2353 = vadd.f32 %v1584, %v2225
  %v2354 = vadd.f32 %v1585, %v2226
  %v2355 = vadd.f32 %v1586, %v2227
  %v2356 = vadd.f32 %v1587, %v2228
  %v2357 = vadd.f32 %v1588, %v2229
  %v2358 = vadd.f32 %v1589, %v2230
  %v2359 = vadd.f32 %v1590, %v2231
  %v2360 = vadd.f32 %v1591, %v2232
  %v2361 = vadd.f32 %v1592, %v2233
  %v2362 = vadd.f32 %v1593, %v2234
  %v2363 = vadd.f32 %v1594, %v2235
  %v2364 = vadd.f32 %v1595, %v2236
  %v2365 = vadd.f32 %v1596, %v2237
  %v2366 = vadd.f32 %v1597, %v2238
  %v2367 = vadd.f32 %v1598, %v2239
  %v2368 = vadd.f32 %v1599, %v2240
  %v2369 = vadd.f32 %v1600, %v2241
  %v2370 = vadd.f32 %v1601, %v2242
  %v2371 = vadd.f32 %v1602, %v2243
  %v2372 = vadd.f32 %v1603, %v2244
  %v2373 = vadd.f32 %v1604, %v2245
  %v2374 = vadd.f32 %v1605, %v2246
  %v2375 = vadd.f32 %v1606, %v2247
  %v2376 = vadd.f32 %v1607, %v2248
  %v2377 = vadd.f32 %v1608, %v2249
  %v2378 = vadd.f32 %v1609, %v2250
  %v2379 = vadd.f32 %v1610, %v2251
  %v2380 = vadd.f32 %v1611, %v2252
  %v2381 = vadd.f32 %v1612, %v2253
  %v2382 = vadd.f32 %v1613, %v2254
  %v2383 = vadd.f32 %v1614, %v2255
  %v2384 = vadd.f32 %v1615, %v2256
  %v2385 = vadd.f32 %v1616, %v2257
  %v2386 = vadd.f32 %v1617, %v2258
  %v2387 = vadd.f32 %v1618, %v2259
  %v2388 = vadd.f32 %v1619, %v2260
  %v2389 = vadd.f32 %v1620, %v2261
  %v2390 = vadd.f32 %v1621, %v2262
  %v2391 = vadd.f32 %v1622, %v2263
  %v2392 = vadd.f32 %v1623, %v2264
  %v2393 = vadd.f32 %v1624, %v2265
  %v2394 = vadd.f32 %v1625, %v2266
  %v2395 = vadd.f32 %v1626, %v2267
  %v2396 = vadd.f32 %v1627, %v2268
  %v2397 = vadd.f32 %v1628, %v2269
  %v2398 = vadd.f32 %v1629, %v2270
  %v2399 = vadd.f32 %v1630, %v2271
  %v2400 = vadd.f32 %v1631, %v2272
  %v2401 = vadd.f32 %v1632, %v2273
  %v2402 = vadd.f32 %v1633, %v2274
  %v2403 = vadd.f32 %v1634, %v2275
  %v2404 = vadd.f32 %v1635, %v2276
  %v2405 = vadd.f32 %v1636, %v2277
  %v2406 = vadd.f32 %v1637, %v2278
  %v2407 = vadd.f32 %v1638, %v2279
  %v2408 = vadd.f32 %v1639, %v2280
  %v2409 = vadd.f32 %v1640, %v2281
  %v2410 = vadd.f32 %v1641, %v2282
  %v2411 = vadd.f32 %v1642, %v2283
  %v2412 = vadd.f32 %v1643, %v2284
  %v2413 = vadd.f32 %v1644, %v2285
  %v2414 = vadd.f32 %v1645, %v2286
  %v2415 = vadd.f32 %v1646, %v2287
  %v2416 = vadd.f32 %v1647, %v2288
  %v2417 = vadd.f32 %v1648, %v2289
  %v2418 = vadd.f32 %v1649, %v2290
  %v2419 = vadd.f32 %v1650, %v2291
  %v2420 = vadd.f32 %v1651, %v2292
  %v2421 = vadd.f32 %v1652, %v2293
  %v2422 = vadd.f32 %v1653, %v2294
  %v2423 = vadd.f32 %v1654, %v2295
  %v2424 = vadd.f32 %v1655, %v2296
  %v2425 = vadd.f32 %v1656, %v2297
  %v2426 = vadd.f32 %v1657, %v2298
  %v2427 = vadd.f32 %v1658, %v2299
  %v2428 = vadd.f32 %v1659, %v2300
  %v2429 = vadd.f32 %v1660, %v2301
  %v2430 = vadd.f32 %v1661, %v2302
  %v2431 = vadd.f32 %v1662, %v2303
  %v2432 = vadd.f32 %v1663, %v2304
  %v2433 = vadd.f32 %v1664, %v2305
  %v2434 = vadd.f32 %v1665, %v2306
  %v2435 = vadd.f32 %v1666, %v2307
  %v2436 = vadd.f32 %v1667, %v2308
  %v2437 = vadd.f32 %v1668, %v2309
  %v2438 = vadd.f32 %v1669, %v2310
  %v2439 = vadd.f32 %v1670, %v2311
  %v2440 = vadd.f32 %v1671, %v2312
  %v2441 = vadd.f32 %v1672, %v2313
  %v2442 = vadd.f32 %v1673, %v2314
  %v2443 = vadd.f32 %v1674, %v2315
  %v2444 = vadd.f32 %v1675, %v2316
  %v2445 = vadd.f32 %v1676, %v2317
  %v2446 = vadd.f32 %v1677, %v2318
  %vm2447 = vcmask 121856
  %2448 = vst.msk [vmem:[%s2] sm:$0xff] %vm2447, %v2319
  %2449 = vst.msk [vmem:[%s2 + $0x8] sm:$0xff] %vm2447, %v2320
  %2450 = vst.msk [vmem:[%s2 + $0x10] sm:$0xff] %vm2447, %v2321
  %2451 = vst.msk [vmem:[%s2 + $0x18] sm:$0xff] %vm2447, %v2322
  %2452 = vst.msk [vmem:[%s2 + $0x20] sm:$0xff] %vm2447, %v2323
  %2453 = vst.msk [vmem:[%s2 + $0x28] sm:$0xff] %vm2447, %v2324
  %2454 = vst.msk [vmem:[%s2 + $0x30] sm:$0xff] %vm2447, %v2325
  %2455 = vst.msk [vmem:[%s2 + $0x38] sm:$0xff] %vm2447, %v2326
  %2456 = vst.msk [vmem:[%s2 + $0x40] sm:$0xff] %vm2447, %v2327
  %2457 = vst.msk [vmem:[%s2 + $0x48] sm:$0xff] %vm2447, %v2328
  %2458 = vst.msk [vmem:[%s2 + $0x50] sm:$0xff] %vm2447, %v2329
  %2459 = vst.msk [vmem:[%s2 + $0x58] sm:$0xff] %vm2447, %v2330
  %2460 = vst.msk [vmem:[%s2 + $0x60] sm:$0xff] %vm2447, %v2331
  %2461 = vst.msk [vmem:[%s2 + $0x68] sm:$0xff] %vm2447, %v2332
  %2462 = vst.msk [vmem:[%s2 + $0x70] sm:$0xff] %vm2447, %v2333
  %2463 = vst.msk [vmem:[%s2 + $0x78] sm:$0xff] %vm2447, %v2334
  %2464 = vst.msk [vmem:[%s2 + $0x80] sm:$0xff] %vm2447, %v2335
  %2465 = vst.msk [vmem:[%s2 + $0x88] sm:$0xff] %vm2447, %v2336
  %2466 = vst.msk [vmem:[%s2 + $0x90] sm:$0xff] %vm2447, %v2337
  %2467 = vst.msk [vmem:[%s2 + $0x98] sm:$0xff] %vm2447, %v2338
  %2468 = vst.msk [vmem:[%s2 + $0xa0] sm:$0xff] %vm2447, %v2339
  %2469 = vst.msk [vmem:[%s2 + $0xa8] sm:$0xff] %vm2447, %v2340
  %2470 = vst.msk [vmem:[%s2 + $0xb0] sm:$0xff] %vm2447, %v2341
  %2471 = vst.msk [vmem:[%s2 + $0xb8] sm:$0xff] %vm2447, %v2342
  %2472 = vst.msk [vmem:[%s2 + $0xc0] sm:$0xff] %vm2447, %v2343
  %2473 = vst.msk [vmem:[%s2 + $0xc8] sm:$0xff] %vm2447, %v2344
  %2474 = vst.msk [vmem:[%s2 + $0xd0] sm:$0xff] %vm2447, %v2345
  %2475 = vst.msk [vmem:[%s2 + $0xd8] sm:$0xff] %vm2447, %v2346
  %2476 = vst.msk [vmem:[%s2 + $0xe0] sm:$0xff] %vm2447, %v2347
  %2477 = vst.msk [vmem:[%s2 + $0xe8] sm:$0xff] %vm2447, %v2348
  %2478 = vst.msk [vmem:[%s2 + $0xf0] sm:$0xff] %vm2447, %v2349
  %2479 = vst.msk [vmem:[%s2 + $0xf8] sm:$0xff] %vm2447, %v2350
  %2480 = vst.msk [vmem:[%s2 + $0x100] sm:$0xff] %vm2447, %v2351
  %2481 = vst.msk [vmem:[%s2 + $0x108] sm:$0xff] %vm2447, %v2352
  %2482 = vst.msk [vmem:[%s2 + $0x110] sm:$0xff] %vm2447, %v2353
  %2483 = vst.msk [vmem:[%s2 + $0x118] sm:$0xff] %vm2447, %v2354
  %2484 = vst.msk [vmem:[%s2 + $0x120] sm:$0xff] %vm2447, %v2355
  %2485 = vst.msk [vmem:[%s2 + $0x128] sm:$0xff] %vm2447, %v2356
  %2486 = vst.msk [vmem:[%s2 + $0x130] sm:$0xff] %vm2447, %v2357
  %2487 = vst.msk [vmem:[%s2 + $0x138] sm:$0xff] %vm2447, %v2358
  %2488 = vst.msk [vmem:[%s2 + $0x140] sm:$0xff] %vm2447, %v2359
  %2489 = vst.msk [vmem:[%s2 + $0x148] sm:$0xff] %vm2447, %v2360
  %2490 = vst.msk [vmem:[%s2 + $0x150] sm:$0xff] %vm2447, %v2361
  %2491 = vst.msk [vmem:[%s2 + $0x158] sm:$0xff] %vm2447, %v2362
  %2492 = vst.msk [vmem:[%s2 + $0x160] sm:$0xff] %vm2447, %v2363
  %2493 = vst.msk [vmem:[%s2 + $0x168] sm:$0xff] %vm2447, %v2364
  %2494 = vst.msk [vmem:[%s2 + $0x170] sm:$0xff] %vm2447, %v2365
  %2495 = vst.msk [vmem:[%s2 + $0x178] sm:$0xff] %vm2447, %v2366
  %2496 = vst.msk [vmem:[%s2 + $0x180] sm:$0xff] %vm2447, %v2367
  %2497 = vst.msk [vmem:[%s2 + $0x188] sm:$0xff] %vm2447, %v2368
  %2498 = vst.msk [vmem:[%s2 + $0x190] sm:$0xff] %vm2447, %v2369
  %2499 = vst.msk [vmem:[%s2 + $0x198] sm:$0xff] %vm2447, %v2370
  %2500 = vst.msk [vmem:[%s2 + $0x1a0] sm:$0xff] %vm2447, %v2371
  %2501 = vst.msk [vmem:[%s2 + $0x1a8] sm:$0xff] %vm2447, %v2372
  %2502 = vst.msk [vmem:[%s2 + $0x1b0] sm:$0xff] %vm2447, %v2373
  %2503 = vst.msk [vmem:[%s2 + $0x1b8] sm:$0xff] %vm2447, %v2374
  %2504 = vst.msk [vmem:[%s2 + $0x1c0] sm:$0xff] %vm2447, %v2375
  %2505 = vst.msk [vmem:[%s2 + $0x1c8] sm:$0xff] %vm2447, %v2376
  %2506 = vst.msk [vmem:[%s2 + $0x1d0] sm:$0xff] %vm2447, %v2377
  %2507 = vst.msk [vmem:[%s2 + $0x1d8] sm:$0xff] %vm2447, %v2378
  %2508 = vst.msk [vmem:[%s2 + $0x1e0] sm:$0xff] %vm2447, %v2379
  %2509 = vst.msk [vmem:[%s2 + $0x1e8] sm:$0xff] %vm2447, %v2380
  %2510 = vst.msk [vmem:[%s2 + $0x1f0] sm:$0xff] %vm2447, %v2381
  %2511 = vst.msk [vmem:[%s2 + $0x1f8] sm:$0xff] %vm2447, %v2382
  %2512 = vst.msk [vmem:[%s2 + $0x200] sm:$0xff] %vm2447, %v2383
  %2513 = vst.msk [vmem:[%s2 + $0x208] sm:$0xff] %vm2447, %v2384
  %2514 = vst.msk [vmem:[%s2 + $0x210] sm:$0xff] %vm2447, %v2385
  %2515 = vst.msk [vmem:[%s2 + $0x218] sm:$0xff] %vm2447, %v2386
  %2516 = vst.msk [vmem:[%s2 + $0x220] sm:$0xff] %vm2447, %v2387
  %2517 = vst.msk [vmem:[%s2 + $0x228] sm:$0xff] %vm2447, %v2388
  %2518 = vst.msk [vmem:[%s2 + $0x230] sm:$0xff] %vm2447, %v2389
  %2519 = vst.msk [vmem:[%s2 + $0x238] sm:$0xff] %vm2447, %v2390
  %2520 = vst.msk [vmem:[%s2 + $0x240] sm:$0xff] %vm2447, %v2391
  %2521 = vst.msk [vmem:[%s2 + $0x248] sm:$0xff] %vm2447, %v2392
  %2522 = vst.msk [vmem:[%s2 + $0x250] sm:$0xff] %vm2447, %v2393
  %2523 = vst.msk [vmem:[%s2 + $0x258] sm:$0xff] %vm2447, %v2394
  %2524 = vst.msk [vmem:[%s2 + $0x260] sm:$0xff] %vm2447, %v2395
  %2525 = vst.msk [vmem:[%s2 + $0x268] sm:$0xff] %vm2447, %v2396
  %2526 = vst.msk [vmem:[%s2 + $0x270] sm:$0xff] %vm2447, %v2397
  %2527 = vst.msk [vmem:[%s2 + $0x278] sm:$0xff] %vm2447, %v2398
  %2528 = vst.msk [vmem:[%s2 + $0x280] sm:$0xff] %vm2447, %v2399
  %2529 = vst.msk [vmem:[%s2 + $0x288] sm:$0xff] %vm2447, %v2400
  %2530 = vst.msk [vmem:[%s2 + $0x290] sm:$0xff] %vm2447, %v2401
  %2531 = vst.msk [vmem:[%s2 + $0x298] sm:$0xff] %vm2447, %v2402
  %2532 = vst.msk [vmem:[%s2 + $0x2a0] sm:$0xff] %vm2447, %v2403
  %2533 = vst.msk [vmem:[%s2 + $0x2a8] sm:$0xff] %vm2447, %v2404
  %2534 = vst.msk [vmem:[%s2 + $0x2b0] sm:$0xff] %vm2447, %v2405
  %2535 = vst.msk [vmem:[%s2 + $0x2b8] sm:$0xff] %vm2447, %v2406
  %2536 = vst.msk [vmem:[%s2 + $0x2c0] sm:$0xff] %vm2447, %v2407
  %2537 = vst.msk [vmem:[%s2 + $0x2c8] sm:$0xff] %vm2447, %v2408
  %2538 = vst.msk [vmem:[%s2 + $0x2d0] sm:$0xff] %vm2447, %v2409
  %2539 = vst.msk [vmem:[%s2 + $0x2d8] sm:$0xff] %vm2447, %v2410
  %2540 = vst.msk [vmem:[%s2 + $0x2e0] sm:$0xff] %vm2447, %v2411
  %2541 = vst.msk [vmem:[%s2 + $0x2e8] sm:$0xff] %vm2447, %v2412
  %2542 = vst.msk [vmem:[%s2 + $0x2f0] sm:$0xff] %vm2447, %v2413
  %2543 = vst.msk [vmem:[%s2 + $0x2f8] sm:$0xff] %vm2447, %v2414
  %2544 = vst.msk [vmem:[%s2 + $0x300] sm:$0xff] %vm2447, %v2415
  %2545 = vst.msk [vmem:[%s2 + $0x308] sm:$0xff] %vm2447, %v2416
  %2546 = vst.msk [vmem:[%s2 + $0x310] sm:$0xff] %vm2447, %v2417
  %2547 = vst.msk [vmem:[%s2 + $0x318] sm:$0xff] %vm2447, %v2418
  %2548 = vst.msk [vmem:[%s2 + $0x320] sm:$0xff] %vm2447, %v2419
  %2549 = vst.msk [vmem:[%s2 + $0x328] sm:$0xff] %vm2447, %v2420
  %2550 = vst.msk [vmem:[%s2 + $0x330] sm:$0xff] %vm2447, %v2421
  %2551 = vst.msk [vmem:[%s2 + $0x338] sm:$0xff] %vm2447, %v2422
  %2552 = vst.msk [vmem:[%s2 + $0x340] sm:$0xff] %vm2447, %v2423
  %2553 = vst.msk [vmem:[%s2 + $0x348] sm:$0xff] %vm2447, %v2424
  %2554 = vst.msk [vmem:[%s2 + $0x350] sm:$0xff] %vm2447, %v2425
  %2555 = vst.msk [vmem:[%s2 + $0x358] sm:$0xff] %vm2447, %v2426
  %2556 = vst.msk [vmem:[%s2 + $0x360] sm:$0xff] %vm2447, %v2427
  %2557 = vst.msk [vmem:[%s2 + $0x368] sm:$0xff] %vm2447, %v2428
  %2558 = vst.msk [vmem:[%s2 + $0x370] sm:$0xff] %vm2447, %v2429
  %2559 = vst.msk [vmem:[%s2 + $0x378] sm:$0xff] %vm2447, %v2430
  %2560 = vst.msk [vmem:[%s2 + $0x380] sm:$0xff] %vm2447, %v2431
  %2561 = vst.msk [vmem:[%s2 + $0x388] sm:$0xff] %vm2447, %v2432
  %2562 = vst.msk [vmem:[%s2 + $0x390] sm:$0xff] %vm2447, %v2433
  %2563 = vst.msk [vmem:[%s2 + $0x398] sm:$0xff] %vm2447, %v2434
  %2564 = vst.msk [vmem:[%s2 + $0x3a0] sm:$0xff] %vm2447, %v2435
  %2565 = vst.msk [vmem:[%s2 + $0x3a8] sm:$0xff] %vm2447, %v2436
  %2566 = vst.msk [vmem:[%s2 + $0x3b0] sm:$0xff] %vm2447, %v2437
  %2567 = vst.msk [vmem:[%s2 + $0x3b8] sm:$0xff] %vm2447, %v2438
  %2568 = vst.msk [vmem:[%s2 + $0x3c0] sm:$0xff] %vm2447, %v2439
  %2569 = vst.msk [vmem:[%s2 + $0x3c8] sm:$0xff] %vm2447, %v2440
  %2570 = vst.msk [vmem:[%s2 + $0x3d0] sm:$0xff] %vm2447, %v2441
  %2571 = vst.msk [vmem:[%s2 + $0x3d8] sm:$0xff] %vm2447, %v2442
  %2572 = vst.msk [vmem:[%s2 + $0x3e0] sm:$0xff] %vm2447, %v2443
  %2573 = vst.msk [vmem:[%s2 + $0x3e8] sm:$0xff] %vm2447, %v2444
  %2574 = vst.msk [vmem:[%s2 + $0x3f0] sm:$0xff] %vm2447, %v2445
  %2575 = vst.msk [vmem:[%s2 + $0x3f8] sm:$0xff] %vm2447, %v2446
  // Predicated region
  $region10: #{tpu_custom_call.1} parent=0 // pred_check
    _
  $region11: #{tpu_custom_call.1} parent=0 // pred_check_branch
    %2577 = sbr.rel (0) target = $region13
  $region12: #{tpu_custom_call.1} parent=0 // pred_region
    _
  $region13: #{tpu_custom_call.1} parent=0 // pred_fallthru
    _
  // Predicated region
  $region14: #{tpu_custom_call.1} parent=0 // pred_check
    _
  $region15: #{tpu_custom_call.1} parent=0 // pred_check_branch
    %2579 = sbr.rel (0) target = $region17
  $region16: #{tpu_custom_call.1} parent=0 // pred_region
    _
  $region17: #{tpu_custom_call.1} parent=0 // pred_fallthru
    _

</llo_original>
